<compile_context>
chip_gen: v7x
topology: tpu7x:2x2x1
jax: 0.10.0
libtpu: 0.0.40
codegen_flags: <defaults>
</compile_context>

<pallas_src>
import functools

import jax
import jax.numpy as jnp
from jax.experimental import pallas as pl
from jax.experimental.pallas import tpu as pltpu


# ----------------------------- helpers -----------------------------

def _choose_tile(total: int, target: int) -> int:
    """Largest tile <= target that evenly divides `total`; falls back to the full extent."""
    t = min(target, total)
    return t if total % t == 0 else total


# ----------------------------- Linear (matmul + bias) kernel -----------------------------

def _linear_bias_kernel(x_ref, w_ref, b_ref, o_ref):
    # Cast the activation tile to the (bf16) weight dtype -> native MXU path, f32 accumulation.
    x = x_ref[...].astype(w_ref.dtype)
    acc = jnp.dot(x, w_ref[...], preferred_element_type=jnp.float32)
    o_ref[...] = (acc + b_ref[...].astype(jnp.float32)).astype(o_ref.dtype)


def linear_bias(x, w_t, b2d, *, out_dtype=None, tile_s=256, tile_n=1536):
    """x: (S, D); w_t: (D, N) pre-transposed (bf16) weight; b2d: (1, N). Returns (S, N)."""
    S, D = x.shape
    N = w_t.shape[1]
    out_dtype = out_dtype or x.dtype
    ts = _choose_tile(S, tile_s)
    tn = _choose_tile(N, tile_n)
    cost = pl.CostEstimate(
        flops=2 * S * D * N,
        transcendentals=0,
        bytes_accessed=(S * D * jnp.dtype(x.dtype).itemsize
                        + D * N * jnp.dtype(w_t.dtype).itemsize
                        + S * N * jnp.dtype(out_dtype).itemsize
                        + N * 4),
    )
    return pl.pallas_call(
        _linear_bias_kernel,
        out_shape=jax.ShapeDtypeStruct((S, N), out_dtype),
        grid_spec=pltpu.PrefetchScalarGridSpec(
            num_scalar_prefetch=0,
            grid=(S // ts, N // tn),
            in_specs=[
                pl.BlockSpec((ts, D), lambda i, j: (i, 0)),   # x row tile
                pl.BlockSpec((D, tn), lambda i, j: (0, j)),   # weight column tile (bf16)
                pl.BlockSpec((1, tn), lambda i, j: (0, j)),   # bias column tile
            ],
            out_specs=pl.BlockSpec((ts, tn), lambda i, j: (i, j)),
        ),
        # NOTE: per-step footprint (ts, D) + (D, tn) + (ts, tn), double-buffered, stays well under
        # the default scoped VMEM even at full Qwen-VL sizes with bf16 weights; raise
        # vmem_limit_bytes here only if tiles are enlarged.
        compiler_params=pltpu.CompilerParams(
            dimension_semantics=("parallel", "parallel")),
        cost_estimate=cost,
    )(x, w_t, b2d)


# ----------------------------- Flash attention kernel (block-diagonal mask) -----------------------------

def _flash_attention_kernel(ov_ref, q_ref, k_ref, v_ref, sq_ref, sk_ref, o_ref,
                            m_sc, l_sc, acc_sc):
    i = pl.program_id(1)
    j = pl.program_id(2)

    @pl.when(j == 0)
    def _init():
        m_sc[...] = jnp.full(m_sc.shape, -1e30, m_sc.dtype)   # finite: no NaN from exp(m_prev - m_new)
        l_sc[...] = jnp.zeros(l_sc.shape, l_sc.dtype)
        acc_sc[...] = jnp.zeros(acc_sc.shape, acc_sc.dtype)

    # Skip KV tiles whose segment range does not overlap this q tile's (block-diagonal mask).
    @pl.when(ov_ref[i, j] != 0)
    def _compute():
        # bf16 x bf16 -> f32 scores (softmax scale already folded into q by the wrapper).
        s = jax.lax.dot_general(q_ref[...], k_ref[...], (((1,), (1,)), ((), ())),
                                preferred_element_type=jnp.float32)          # (tq, tk)
        mask = sq_ref[...] == sk_ref[...]                                    # (tq, tk) bool
        s = jnp.where(mask, s, jnp.float32(-1e30))

        m_prev = m_sc[...]
        m_new = jnp.maximum(m_prev, jnp.max(s, axis=-1, keepdims=True))
        alpha = jnp.exp(m_prev - m_new)
        # `where` (not just the -1e30 fill) so fully-masked rows in a partially-live tile add 0.
        p = jnp.where(mask, jnp.exp(s - m_new), jnp.float32(0.0))

        l_sc[...] = alpha * l_sc[...] + jnp.sum(p, axis=-1, keepdims=True)
        acc_sc[...] = alpha * acc_sc[...] + jnp.dot(
            p.astype(v_ref.dtype), v_ref[...], preferred_element_type=jnp.float32)
        m_sc[...] = m_new

    @pl.when(j == pl.num_programs(2) - 1)
    def _finalize():
        # Deferred normalization: TQ x Dh multiplies, reciprocal on the EUP slot.
        o_ref[...] = (acc_sc[...] * pl.reciprocal(l_sc[...], approx=True)).astype(o_ref.dtype)


def flash_attention(q, k, v, seg, *, tile_q=256, tile_k=512):
    """q, k, v: (H, S, Dh) bf16 (q already scaled); seg: (S,) int32 segment ids. Returns (H, S, Dh)."""
    H, S, Dh = q.shape
    tq = _choose_tile(S, tile_q)
    tk = _choose_tile(S, tile_k)
    nq = S // tq
    nk = S // tk

    seg = seg.astype(jnp.int32)
    seg_q = seg.reshape(S, 1)
    seg_k = seg.reshape(1, S)

    # Tiny (nq, nk) tile-liveness table from the block-diagonal cu_seqlens structure (scalar prefetch).
    qt = seg.reshape(nq, tq)
    kt = seg.reshape(nk, tk)
    overlap = ((qt.min(axis=1)[:, None] <= kt.max(axis=1)[None, :]) &
               (kt.min(axis=1)[None, :] <= qt.max(axis=1)[:, None])).astype(jnp.int32)

    itemsize = jnp.dtype(q.dtype).itemsize
    cost = pl.CostEstimate(
        flops=4 * H * S * S * Dh,
        transcendentals=H * S * S,
        bytes_accessed=4 * H * S * Dh * itemsize + 2 * S * 4,
    )
    return pl.pallas_call(
        _flash_attention_kernel,
        out_shape=jax.ShapeDtypeStruct((H, S, Dh), q.dtype),
        grid_spec=pltpu.PrefetchScalarGridSpec(
            num_scalar_prefetch=1,                       # overlap table -> SMEM
            grid=(H, nq, nk),
            in_specs=[
                pl.BlockSpec((None, tq, Dh), lambda h, i, j, ov: (h, i, 0)),  # q tile
                pl.BlockSpec((None, tk, Dh), lambda h, i, j, ov: (h, j, 0)),  # k tile
                pl.BlockSpec((None, tk, Dh), lambda h, i, j, ov: (h, j, 0)),  # v tile
                pl.BlockSpec((tq, 1), lambda h, i, j, ov: (i, 0)),            # seg ids (query rows)
                pl.BlockSpec((1, tk), lambda h, i, j, ov: (0, j)),            # seg ids (key cols)
            ],
            out_specs=pl.BlockSpec((None, tq, Dh), lambda h, i, j, ov: (h, i, 0)),
            scratch_shapes=[
                pltpu.VMEM((tq, 1), jnp.float32),    # running max m
                pltpu.VMEM((tq, 1), jnp.float32),    # running sum l
                pltpu.VMEM((tq, Dh), jnp.float32),   # output accumulator
            ],
        ),
        compiler_params=pltpu.CompilerParams(
            dimension_semantics=("parallel", "parallel", "arbitrary")),
        cost_estimate=cost,
    )(overlap, q, k, v, seg_q, seg_k)


# ----------------------------- Glue: rotary embedding (elementwise, f32) -----------------------------

def _rotate_half(x):
    half = x.shape[-1] // 2
    return jnp.concatenate([-x[..., half:], x[..., :half]], axis=-1)


def _apply_rotary_pos_emb_vision(x, freqs):
    """x: (H, S, Dh); freqs: (S, Dh//2). Matches apply_rotary_pos_emb_vision (f32 math)."""
    orig_dtype = x.dtype
    xf = x.astype(jnp.float32)
    cos = jnp.concatenate([jnp.cos(freqs), jnp.cos(freqs)], axis=-1)[None, :, :]  # (1, S, Dh)
    sin = jnp.concatenate([jnp.sin(freqs), jnp.sin(freqs)], axis=-1)[None, :, :]
    return (xf * cos + _rotate_half(xf) * sin).astype(orig_dtype)


# ----------------------------- Parameters -----------------------------

def init_vision_attention_params(key, dim, dtype=jnp.float32):
    """Master (PyTorch-layout) parameters, f32."""
    k1, k2, k3, k4 = jax.random.split(key, 4)
    return {
        "wqkv": jax.random.normal(k1, (3 * dim, dim), dtype) * 0.02,
        "bqkv": jax.random.normal(k2, (3 * dim,), dtype) * 0.02,
        "wproj": jax.random.normal(k3, (dim, dim), dtype) * 0.02,
        "bproj": jax.random.normal(k4, (dim,), dtype) * 0.02,
    }


def prepare_kernel_params(params, compute_dtype=jnp.bfloat16):
    """Pre-transpose + cast ONCE at load time: bf16 MXU operands, f32 bias."""
    dim = params["wproj"].shape[0]
    return {
        "wqkv_t": params["wqkv"].T.astype(compute_dtype),     # (D, 3D) bf16
        "bqkv": params["bqkv"].reshape(1, 3 * dim).astype(jnp.float32),
        "wproj_t": params["wproj"].T.astype(compute_dtype),   # (D, D) bf16
        "bproj": params["bproj"].reshape(1, dim).astype(jnp.float32),
    }


# ----------------------------- Forward wrapper -----------------------------

def vision_attention_forward(hidden_states, cu_seqlens, rotary_pos_emb, kparams, *, num_heads):
    S, D = hidden_states.shape
    head_dim = D // num_heads
    scale = float(head_dim) ** -0.5
    out_dtype = hidden_states.dtype

    # 1) fused QKV projection (Pallas, bf16 MXU / f32 acc)
    qkv = linear_bias(hidden_states, kparams["wqkv_t"], kparams["bqkv"],
                      out_dtype=out_dtype)                                    # (S, 3D)

    # 2) split heads + RoPE (f32) + fold softmax scale + cast MXU operands to bf16.
    #    XLA fuses the transpose with the elementwise RoPE/scale/cast pass.
    qkv = qkv.reshape(S, 3, num_heads, head_dim)
    q = jnp.transpose(qkv[:, 0], (1, 0, 2))                                   # (H, S, Dh)
    k = jnp.transpose(qkv[:, 1], (1, 0, 2))
    v = jnp.transpose(qkv[:, 2], (1, 0, 2))
    if rotary_pos_emb is not None:
        q = _apply_rotary_pos_emb_vision(q, rotary_pos_emb)
        k = _apply_rotary_pos_emb_vision(k, rotary_pos_emb)
    q = (q.astype(jnp.float32) * scale).astype(jnp.bfloat16)   # scale folded into q
    k = k.astype(jnp.bfloat16)
    v = v.astype(jnp.bfloat16)

    # 3) block-diagonal flash attention over cu_seqlens windows (Pallas)
    positions = jnp.arange(S, dtype=cu_seqlens.dtype)
    seg = jnp.searchsorted(cu_seqlens, positions, side="right").astype(jnp.int32)
    attn = flash_attention(q, k, v, seg)                                      # (H, S, Dh) bf16

    # 4) output projection (Pallas) — attention output stays bf16 straight into the MXU.
    attn = jnp.transpose(attn, (1, 0, 2)).reshape(S, D)
    return linear_bias(attn, kparams["wproj_t"], kparams["bproj"], out_dtype=out_dtype)


# ----------------------------- Pure-JAX reference (for checking) -----------------------------

def _reference_forward(hidden_states, cu_seqlens, rotary_pos_emb, params, *, num_heads):
    HP = jax.lax.Precision.HIGHEST
    S, D = hidden_states.shape
    Dh = D // num_heads
    scale = float(Dh) ** -0.5
    qkv = jnp.dot(hidden_states, params["wqkv"].T, precision=HP) + params["bqkv"]
    qkv = qkv.reshape(S, 3, num_heads, Dh)
    q = jnp.transpose(qkv[:, 0], (1, 0, 2))
    k = jnp.transpose(qkv[:, 1], (1, 0, 2))
    v = jnp.transpose(qkv[:, 2], (1, 0, 2))
    if rotary_pos_emb is not None:
        q = _apply_rotary_pos_emb_vision(q, rotary_pos_emb)
        k = _apply_rotary_pos_emb_vision(k, rotary_pos_emb)
    seg = jnp.searchsorted(cu_seqlens, jnp.arange(S, dtype=cu_seqlens.dtype), side="right")
    mask = seg[:, None] == seg[None, :]
    s = jnp.einsum("hqd,hkd->hqk", q, k, precision=HP) * scale
    s = jnp.where(mask[None], s, -jnp.inf)
    p = jax.nn.softmax(s, axis=-1)
    o = jnp.einsum("hqk,hkd->hqd", p, v, precision=HP)
    o = jnp.transpose(o, (1, 0, 2)).reshape(S, D)
    return jnp.dot(o, params["wproj"].T, precision=HP) + params["bproj"]


if __name__ == "__main__":
    # Small shapes consistent with the module (scaled-down Qwen-VL vision block).
    dim = 128
    num_heads = 4
    head_dim = dim // num_heads       # 32
    seq_len = 128

    key = jax.random.PRNGKey(0)
    kx, kp = jax.random.split(key)
    hidden_states = jax.random.normal(kx, (seq_len, dim), dtype=jnp.float32)
    params = init_vision_attention_params(kp, dim)
    kparams = prepare_kernel_params(params)

    # rotary frequencies: (seq, head_dim // 2), as produced by VisionRotaryEmbedding
    inv_freq = 1.0 / (10000.0 ** (jnp.arange(0, head_dim, 2, dtype=jnp.float32) / head_dim))
    rotary_pos_emb = jnp.arange(seq_len, dtype=jnp.float32)[:, None] * inv_freq[None, :]

    # two attention windows (cu_seqlens) covering the full sequence
    cu_seqlens = jnp.array([0, 48, seq_len], dtype=jnp.int32)

    fwd = jax.jit(functools.partial(vision_attention_forward, num_heads=num_heads))
    out = fwd(hidden_states, cu_seqlens, rotary_pos_emb, kparams)
    out = jax.block_until_ready(out)

    ref = _reference_forward(hidden_states, cu_seqlens, rotary_pos_emb, params,
                             num_heads=num_heads)
    assert out.shape == (seq_len, dim)
    max_err = float(jnp.max(jnp.abs(out.astype(jnp.float32) - ref)))
    # bf16 MXU operands vs f32 HIGHEST-precision reference -> loosened tolerance.
    assert max_err < 1e-2, f"max abs err = {max_err}"

    print("KERNEL_OK")
</pallas_src>

<mosaic_0001>
module attributes {stable_mosaic.version = 11 : i64} {
  func.func @_linear_bias_kernel(%arg0: i32, %arg1: i32, %arg2: memref<128x128xf32, #tpu.memory_space<vmem>>, %arg3: memref<128x384xbf16, #tpu.memory_space<vmem>>, %arg4: memref<1x384xf32, #tpu.memory_space<vmem>>, %arg5: memref<128x384xf32, #tpu.memory_space<vmem>>) attributes {dimension_semantics = [#tpu.dimension_semantics<parallel>, #tpu.dimension_semantics<parallel>], iteration_bounds = array<i64: 1, 1>, scalar_prefetch = 0 : i64, scratch_operands = 0 : i64, tpu.core_type = #tpu.core_type<tc>, window_params = [{transform_indices = @transform_0, window_bounds = array<i64: 128, 128>}, {transform_indices = @transform_1, window_bounds = array<i64: 128, 384>}, {transform_indices = @transform_2, window_bounds = array<i64: 1, 384>}, {transform_indices = @transform_3, window_bounds = array<i64: 128, 384>}]} {
    %c0 = arith.constant 0 : index
    %c0_0 = arith.constant 0 : index
    %0 = vector.load %arg2[%c0, %c0_0] : memref<128x128xf32, #tpu.memory_space<vmem>>, vector<128x128xf32>
    %1 = arith.truncf %0 : vector<128x128xf32> to vector<128x128xbf16>
    %c0_1 = arith.constant 0 : index
    %c0_2 = arith.constant 0 : index
    %2 = vector.load %arg3[%c0_1, %c0_2] : memref<128x384xbf16, #tpu.memory_space<vmem>>, vector<128x384xbf16>
    %cst = arith.constant dense<0.000000e+00> : vector<128x384xf32>
    %3 = tpu.matmul %1, %2, %cst {dimension_numbers = #tpu.dot_dimension_numbers<[1], [0], [0], [1], [0, 0, 1, 1], [], []>} : vector<128x128xbf16>, vector<128x384xbf16>, vector<128x384xf32> -> vector<128x384xf32>
    %c0_3 = arith.constant 0 : index
    %c0_4 = arith.constant 0 : index
    %4 = vector.load %arg4[%c0_3, %c0_4] : memref<1x384xf32, #tpu.memory_space<vmem>>, vector<1x384xf32>
    %5 = vector.broadcast %4 : vector<1x384xf32> to vector<128x384xf32>
    %6 = arith.addf %3, %5 : vector<128x384xf32>
    %c0_5 = arith.constant 0 : index
    %c0_6 = arith.constant 0 : index
    %7 = vector.load %arg5[%c0_5, %c0_6] : memref<128x384xf32, #tpu.memory_space<vmem>>, vector<128x384xf32>
    tpu.vector_store %arg5[%c0_5, %c0_6], %6 {strides = array<i32>} : memref<128x384xf32, #tpu.memory_space<vmem>>, vector<128x384xf32>,
    return
  }
  func.func @transform_0(%arg0: i32, %arg1: i32) -> (i32, i32) {
    %c0_i32 = arith.constant 0 : i32
    %c0_i32_0 = arith.constant 0 : i32
    return %arg0, %c0_i32 : i32, i32
  }
  func.func @transform_1(%arg0: i32, %arg1: i32) -> (i32, i32) {
    %c0_i32 = arith.constant 0 : i32
    %c0_i32_0 = arith.constant 0 : i32
    return %c0_i32, %arg1 : i32, i32
  }
  func.func @transform_2(%arg0: i32, %arg1: i32) -> (i32, i32) {
    %c0_i32 = arith.constant 0 : i32
    %c0_i32_0 = arith.constant 0 : i32
    return %c0_i32, %arg1 : i32, i32
  }
  func.func @transform_3(%arg0: i32, %arg1: i32) -> (i32, i32) {
    %c0_i32 = arith.constant 0 : i32
    return %arg0, %arg1 : i32, i32
  }
}

module attributes {stable_mosaic.version = 11 : i64} {
  func.func @_flash_attention_kernel(%arg0: i32, %arg1: i32, %arg2: i32, %arg3: memref<1x1xi32, #tpu.memory_space<smem>>, %arg4: memref<1x128x32xbf16, #tpu.memory_space<vmem>>, %arg5: memref<1x128x32xbf16, #tpu.memory_space<vmem>>, %arg6: memref<1x128x32xbf16, #tpu.memory_space<vmem>>, %arg7: memref<128x1xi32, #tpu.memory_space<vmem>>, %arg8: memref<1x128xi32, #tpu.memory_space<vmem>>, %arg9: memref<1x128x32xbf16, #tpu.memory_space<vmem>>, %arg10: memref<128x1xf32, #tpu.memory_space<vmem>>, %arg11: memref<128x1xf32, #tpu.memory_space<vmem>>, %arg12: memref<128x32xf32, #tpu.memory_space<vmem>>) attributes {dimension_semantics = [#tpu.dimension_semantics<parallel>, #tpu.dimension_semantics<parallel>, #tpu.dimension_semantics<arbitrary>], iteration_bounds = array<i64: 4, 1, 1>, scalar_prefetch = 1 : i64, scratch_operands = 3 : i64, tpu.core_type = #tpu.core_type<tc>, window_params = [{transform_indices = @transform_0, window_bounds = array<i64: 1, 128, 32>}, {transform_indices = @transform_1, window_bounds = array<i64: 1, 128, 32>}, {transform_indices = @transform_2, window_bounds = array<i64: 1, 128, 32>}, {transform_indices = @transform_3, window_bounds = array<i64: 128, 1>}, {transform_indices = @transform_4, window_bounds = array<i64: 1, 128>}, {transform_indices = @transform_5, window_bounds = array<i64: 1, 128, 32>}]} {
    %c0_i32 = arith.constant 0 : i32
    %0 = arith.cmpi eq, %arg2, %c0_i32 : i32
    %1 = arith.extui %0 : i1 to i32
    %c0_i32_0 = arith.constant 0 : i32
    %2 = arith.cmpi ne, %1, %c0_i32_0 : i32
    scf.if %2 {
      %cst = arith.constant -1.000000e+30 : f32
      %12 = vector.broadcast %cst : f32 to vector<128x1xf32>
      %c0 = arith.constant 0 : index
      %c0_5 = arith.constant 0 : index
      %13 = vector.load %arg10[%c0, %c0_5] : memref<128x1xf32, #tpu.memory_space<vmem>>, vector<128x1xf32>
      tpu.vector_store %arg10[%c0, %c0_5], %12 {strides = array<i32>} : memref<128x1xf32, #tpu.memory_space<vmem>>, vector<128x1xf32>,
      %cst_6 = arith.constant 0.000000e+00 : f32
      %14 = vector.broadcast %cst_6 : f32 to vector<128x1xf32>
      %c0_7 = arith.constant 0 : index
      %c0_8 = arith.constant 0 : index
      %15 = vector.load %arg11[%c0_7, %c0_8] : memref<128x1xf32, #tpu.memory_space<vmem>>, vector<128x1xf32>
      tpu.vector_store %arg11[%c0_7, %c0_8], %14 {strides = array<i32>} : memref<128x1xf32, #tpu.memory_space<vmem>>, vector<128x1xf32>,
      %cst_9 = arith.constant 0.000000e+00 : f32
      %16 = vector.broadcast %cst_9 : f32 to vector<128x32xf32>
      %c0_10 = arith.constant 0 : index
      %c0_11 = arith.constant 0 : index
      %17 = vector.load %arg12[%c0_10, %c0_11] : memref<128x32xf32, #tpu.memory_space<vmem>>, vector<128x32xf32>
      tpu.vector_store %arg12[%c0_10, %c0_11], %16 {strides = array<i32>} : memref<128x32xf32, #tpu.memory_space<vmem>>, vector<128x32xf32>,
    } else {
    }
    %3 = arith.index_cast %arg1 : i32 to index
    %4 = arith.index_cast %arg2 : i32 to index
    %5 = memref.load %arg3[%3, %4] : memref<1x1xi32, #tpu.memory_space<smem>>
    %c0_i32_1 = arith.constant 0 : i32
    %6 = arith.cmpi ne, %5, %c0_i32_1 : i32
    %7 = arith.extui %6 : i1 to i32
    %c0_i32_2 = arith.constant 0 : i32
    %8 = arith.cmpi ne, %7, %c0_i32_2 : i32
    scf.if %8 {
      %c0 = arith.constant 0 : index
      %c0_5 = arith.constant 0 : index
      %c0_6 = arith.constant 0 : index
      %12 = vector.load %arg4[%c0, %c0_5, %c0_6] : memref<1x128x32xbf16, #tpu.memory_space<vmem>>, vector<1x128x32xbf16>
      %13 = vector.shape_cast %12 : vector<1x128x32xbf16> to vector<128x32xbf16>
      %c0_7 = arith.constant 0 : index
      %c0_8 = arith.constant 0 : index
      %c0_9 = arith.constant 0 : index
      %14 = vector.load %arg5[%c0_7, %c0_8, %c0_9] : memref<1x128x32xbf16, #tpu.memory_space<vmem>>, vector<1x128x32xbf16>
      %15 = vector.shape_cast %14 : vector<1x128x32xbf16> to vector<128x32xbf16>
      %cst = arith.constant dense<0.000000e+00> : vector<128x128xf32>
      %16 = tpu.matmul %13, %15, %cst {dimension_numbers = #tpu.dot_dimension_numbers<[1], [1], [0], [0], [0, 0, 1, 0], [], []>} : vector<128x32xbf16>, vector<128x32xbf16>, vector<128x128xf32> -> vector<128x128xf32>
      %c0_10 = arith.constant 0 : index
      %c0_11 = arith.constant 0 : index
      %17 = vector.load %arg7[%c0_10, %c0_11] : memref<128x1xi32, #tpu.memory_space<vmem>>, vector<128x1xi32>
      %c0_12 = arith.constant 0 : index
      %c0_13 = arith.constant 0 : index
      %18 = vector.load %arg8[%c0_12, %c0_13] : memref<1x128xi32, #tpu.memory_space<vmem>>, vector<1x128xi32>
      %19 = vector.broadcast %17 : vector<128x1xi32> to vector<128x128xi32>
      %20 = vector.broadcast %18 : vector<1x128xi32> to vector<128x128xi32>
      %21 = arith.cmpi eq, %19, %20 : vector<128x128xi32>
      %cst_14 = arith.constant -1.000000e+30 : f32
      %22 = vector.broadcast %cst_14 : f32 to vector<128x128xf32>
      %23 = arith.select %21, %16, %22 : vector<128x128xi1>, vector<128x128xf32>
      %c0_15 = arith.constant 0 : index
      %c0_16 = arith.constant 0 : index
      %24 = vector.load %arg10[%c0_15, %c0_16] : memref<128x1xf32, #tpu.memory_space<vmem>>, vector<128x1xf32>
      %cst_17 = arith.constant dense<0xFF800000> : vector<128xf32>
      %25 = vector.multi_reduction <maximumf>, %23, %cst_17 [1] : vector<128x128xf32> to vector<128xf32>
      %26 = vector.shape_cast %25 : vector<128xf32> to vector<128x1xf32>
      %27 = arith.maximumf %24, %26 : vector<128x1xf32>
      %28 = arith.subf %24, %27 : vector<128x1xf32>
      %29 = math.exp %28 : vector<128x1xf32>
      %30 = vector.broadcast %27 : vector<128x1xf32> to vector<128x128xf32>
      %31 = arith.subf %23, %30 : vector<128x128xf32>
      %32 = math.exp %31 : vector<128x128xf32>
      %cst_18 = arith.constant 0.000000e+00 : f32
      %33 = vector.broadcast %cst_18 : f32 to vector<128x128xf32>
      %34 = arith.select %21, %32, %33 : vector<128x128xi1>, vector<128x128xf32>
      %c0_19 = arith.constant 0 : index
      %c0_20 = arith.constant 0 : index
      %35 = vector.load %arg11[%c0_19, %c0_20] : memref<128x1xf32, #tpu.memory_space<vmem>>, vector<128x1xf32>
      %36 = arith.mulf %29, %35 : vector<128x1xf32>
      %cst_21 = arith.constant dense<0.000000e+00> : vector<128xf32>
      %37 = vector.multi_reduction <add>, %34, %cst_21 [1] : vector<128x128xf32> to vector<128xf32>
      %38 = vector.shape_cast %37 : vector<128xf32> to vector<128x1xf32>
      %39 = arith.addf %36, %38 : vector<128x1xf32>
      %c0_22 = arith.constant 0 : index
      %c0_23 = arith.constant 0 : index
      %40 = vector.load %arg11[%c0_22, %c0_23] : memref<128x1xf32, #tpu.memory_space<vmem>>, vector<128x1xf32>
      tpu.vector_store %arg11[%c0_22, %c0_23], %39 {strides = array<i32>} : memref<128x1xf32, #tpu.memory_space<vmem>>, vector<128x1xf32>,
      %c0_24 = arith.constant 0 : index
      %c0_25 = arith.constant 0 : index
      %41 = vector.load %arg12[%c0_24, %c0_25] : memref<128x32xf32, #tpu.memory_space<vmem>>, vector<128x32xf32>
      %42 = vector.broadcast %29 : vector<128x1xf32> to vector<128x32xf32>
      %43 = arith.mulf %42, %41 : vector<128x32xf32>
      %44 = arith.truncf %34 : vector<128x128xf32> to vector<128x128xbf16>
      %c0_26 = arith.constant 0 : index
      %c0_27 = arith.constant 0 : index
      %c0_28 = arith.constant 0 : index
      %45 = vector.load %arg6[%c0_26, %c0_27, %c0_28] : memref<1x128x32xbf16, #tpu.memory_space<vmem>>, vector<1x128x32xbf16>
      %46 = vector.shape_cast %45 : vector<1x128x32xbf16> to vector<128x32xbf16>
      %cst_29 = arith.constant dense<0.000000e+00> : vector<128x32xf32>
      %47 = tpu.matmul %44, %46, %cst_29 {dimension_numbers = #tpu.dot_dimension_numbers<[1], [0], [0], [1], [0, 0, 1, 1], [], []>} : vector<128x128xbf16>, vector<128x32xbf16>, vector<128x32xf32> -> vector<128x32xf32>
      %48 = arith.addf %43, %47 : vector<128x32xf32>
      %c0_30 = arith.constant 0 : index
      %c0_31 = arith.constant 0 : index
      %49 = vector.load %arg12[%c0_30, %c0_31] : memref<128x32xf32, #tpu.memory_space<vmem>>, vector<128x32xf32>
      tpu.vector_store %arg12[%c0_30, %c0_31], %48 {strides = array<i32>} : memref<128x32xf32, #tpu.memory_space<vmem>>, vector<128x32xf32>,
      %c0_32 = arith.constant 0 : index
      %c0_33 = arith.constant 0 : index
      %50 = vector.load %arg10[%c0_32, %c0_33] : memref<128x1xf32, #tpu.memory_space<vmem>>, vector<128x1xf32>
      tpu.vector_store %arg10[%c0_32, %c0_33], %27 {strides = array<i32>} : memref<128x1xf32, #tpu.memory_space<vmem>>, vector<128x1xf32>,
    } else {
    }
    %c0_i32_3 = arith.constant 0 : i32
    %9 = arith.cmpi eq, %arg2, %c0_i32_3 : i32
    %10 = arith.extui %9 : i1 to i32
    %c0_i32_4 = arith.constant 0 : i32
    %11 = arith.cmpi ne, %10, %c0_i32_4 : i32
    scf.if %11 {
      %c0 = arith.constant 0 : index
      %c0_5 = arith.constant 0 : index
      %12 = vector.load %arg12[%c0, %c0_5] : memref<128x32xf32, #tpu.memory_space<vmem>>, vector<128x32xf32>
      %c0_6 = arith.constant 0 : index
      %c0_7 = arith.constant 0 : index
      %13 = vector.load %arg11[%c0_6, %c0_7] : memref<128x1xf32, #tpu.memory_space<vmem>>, vector<128x1xf32>
      %14 = tpu.reciprocal %13 {approx = true} : vector<128x1xf32> -> vector<128x1xf32>
      %15 = vector.broadcast %14 : vector<128x1xf32> to vector<128x32xf32>
      %16 = arith.mulf %12, %15 : vector<128x32xf32>
      %17 = arith.truncf %16 : vector<128x32xf32> to vector<128x32xbf16>
      %c0_8 = arith.constant 0 : index
      %c0_9 = arith.constant 0 : index
      %c0_10 = arith.constant 0 : index
      %18 = vector.load %arg9[%c0_8, %c0_9, %c0_10] : memref<1x128x32xbf16, #tpu.memory_space<vmem>>, vector<1x128x32xbf16>
      %19 = vector.shape_cast %18 : vector<1x128x32xbf16> to vector<128x32xbf16>
      %20 = vector.shape_cast %17 : vector<128x32xbf16> to vector<1x128x32xbf16>
      tpu.vector_store %arg9[%c0_8, %c0_9, %c0_10], %20 {strides = array<i32>} : memref<1x128x32xbf16, #tpu.memory_space<vmem>>, vector<1x128x32xbf16>,
    } else {
    }
    return
  }
  func.func @transform_0(%arg0: i32, %arg1: i32, %arg2: i32, %arg3: memref<1x1xi32, #tpu.memory_space<smem>>) -> (i32, i32, i32) {
    %c0_i32 = arith.constant 0 : i32
    %c0_i32_0 = arith.constant 0 : i32
    return %arg0, %arg1, %c0_i32 : i32, i32, i32
  }
  func.func @transform_1(%arg0: i32, %arg1: i32, %arg2: i32, %arg3: memref<1x1xi32, #tpu.memory_space<smem>>) -> (i32, i32, i32) {
    %c0_i32 = arith.constant 0 : i32
    %c0_i32_0 = arith.constant 0 : i32
    return %arg0, %arg2, %c0_i32 : i32, i32, i32
  }
  func.func @transform_2(%arg0: i32, %arg1: i32, %arg2: i32, %arg3: memref<1x1xi32, #tpu.memory_space<smem>>) -> (i32, i32, i32) {
    %c0_i32 = arith.constant 0 : i32
    %c0_i32_0 = arith.constant 0 : i32
    return %arg0, %arg2, %c0_i32 : i32, i32, i32
  }
  func.func @transform_3(%arg0: i32, %arg1: i32, %arg2: i32, %arg3: memref<1x1xi32, #tpu.memory_space<smem>>) -> (i32, i32) {
    %c0_i32 = arith.constant 0 : i32
    %c0_i32_0 = arith.constant 0 : i32
    return %arg1, %c0_i32 : i32, i32
  }
  func.func @transform_4(%arg0: i32, %arg1: i32, %arg2: i32, %arg3: memref<1x1xi32, #tpu.memory_space<smem>>) -> (i32, i32) {
    %c0_i32 = arith.constant 0 : i32
    %c0_i32_0 = arith.constant 0 : i32
    return %c0_i32, %arg2 : i32, i32
  }
  func.func @transform_5(%arg0: i32, %arg1: i32, %arg2: i32, %arg3: memref<1x1xi32, #tpu.memory_space<smem>>) -> (i32, i32, i32) {
    %c0_i32 = arith.constant 0 : i32
    %c0_i32_0 = arith.constant 0 : i32
    return %arg0, %arg1, %c0_i32 : i32, i32, i32
  }
}

module attributes {stable_mosaic.version = 11 : i64} {
  func.func @_linear_bias_kernel(%arg0: i32, %arg1: i32, %arg2: memref<128x128xbf16, #tpu.memory_space<vmem>>, %arg3: memref<128x128xbf16, #tpu.memory_space<vmem>>, %arg4: memref<1x128xf32, #tpu.memory_space<vmem>>, %arg5: memref<128x128xf32, #tpu.memory_space<vmem>>) attributes {dimension_semantics = [#tpu.dimension_semantics<parallel>, #tpu.dimension_semantics<parallel>], iteration_bounds = array<i64: 1, 1>, scalar_prefetch = 0 : i64, scratch_operands = 0 : i64, tpu.core_type = #tpu.core_type<tc>, window_params = [{transform_indices = @transform_0, window_bounds = array<i64: 128, 128>}, {transform_indices = @transform_1, window_bounds = array<i64: 128, 128>}, {transform_indices = @transform_2, window_bounds = array<i64: 1, 128>}, {transform_indices = @transform_3, window_bounds = array<i64: 128, 128>}]} {
    %c0 = arith.constant 0 : index
    %c0_0 = arith.constant 0 : index
    %0 = vector.load %arg2[%c0, %c0_0] : memref<128x128xbf16, #tpu.memory_space<vmem>>, vector<128x128xbf16>
    %c0_1 = arith.constant 0 : index
    %c0_2 = arith.constant 0 : index
    %1 = vector.load %arg3[%c0_1, %c0_2] : memref<128x128xbf16, #tpu.memory_space<vmem>>, vector<128x128xbf16>
    %cst = arith.constant dense<0.000000e+00> : vector<128x128xf32>
    %2 = tpu.matmul %0, %1, %cst {dimension_numbers = #tpu.dot_dimension_numbers<[1], [0], [0], [1], [0, 0, 1, 1], [], []>} : vector<128x128xbf16>, vector<128x128xbf16>, vector<128x128xf32> -> vector<128x128xf32>
    %c0_3 = arith.constant 0 : index
    %c0_4 = arith.constant 0 : index
    %3 = vector.load %arg4[%c0_3, %c0_4] : memref<1x128xf32, #tpu.memory_space<vmem>>, vector<1x128xf32>
    %4 = vector.broadcast %3 : vector<1x128xf32> to vector<128x128xf32>
    %5 = arith.addf %2, %4 : vector<128x128xf32>
    %c0_5 = arith.constant 0 : index
    %c0_6 = arith.constant 0 : index
    %6 = vector.load %arg5[%c0_5, %c0_6] : memref<128x128xf32, #tpu.memory_space<vmem>>, vector<128x128xf32>
    tpu.vector_store %arg5[%c0_5, %c0_6], %5 {strides = array<i32>} : memref<128x128xf32, #tpu.memory_space<vmem>>, vector<128x128xf32>,
    return
  }
  func.func @transform_0(%arg0: i32, %arg1: i32) -> (i32, i32) {
    %c0_i32 = arith.constant 0 : i32
    %c0_i32_0 = arith.constant 0 : i32
    return %arg0, %c0_i32 : i32, i32
  }
  func.func @transform_1(%arg0: i32, %arg1: i32) -> (i32, i32) {
    %c0_i32 = arith.constant 0 : i32
    %c0_i32_0 = arith.constant 0 : i32
    return %c0_i32, %arg1 : i32, i32
  }
  func.func @transform_2(%arg0: i32, %arg1: i32) -> (i32, i32) {
    %c0_i32 = arith.constant 0 : i32
    %c0_i32_0 = arith.constant 0 : i32
    return %c0_i32, %arg1 : i32, i32
  }
  func.func @transform_3(%arg0: i32, %arg1: i32) -> (i32, i32) {
    %c0_i32 = arith.constant 0 : i32
    return %arg0, %arg1 : i32, i32
  }
}

</mosaic_0001>

<llo_original>
// kernel: custom-call
$region0: #{custom-call}
  %s0 = inlined_call_operand.vmem [shape: u32[128], index: 0, kind: output, shape index: {}]

// kernel: vision_attention_forward.3
$region0: #{vision_attention_forward.3}
  #allocation0 [shape = 'u32[]', space=smem, size = 0x4, offset = 0x4, fixed_abs, tag = 'smem constant byte address 0x4 - core index']
  #allocation1 [shape = 'u32[144,128]{1,0:T(1,128)}', space=vmem, size = 0x12000, scoped, tag = 'internal scratch']
  %s0 = inlined_call_operand.hbm [shape: f32[128,128], index: 0, kind: input, shape index: {}]
  %s1 = inlined_call_operand.hbm [shape: bf16[128,384], index: 1, kind: input, shape index: {}]
  %s2 = inlined_call_operand.vmem [shape: f32[1,384], index: 2, kind: input, shape index: {}]
  %s3 = inlined_call_operand.vmem [shape: f32[128,384], index: 3, kind: output, shape index: {}]
  %s4 = sld [smem:[#allocation0]]
  $region30: #{vision_attention_forward.3} parent=0
    _
  %s6 = ssub.s32 1, %s4
  %s7 = scalar_select 0, %s6, %s4
  $region1: #{vision_attention_forward.3} parent=0
    #allocation2 [shape = 'u8[65536]{0}', space=vmem, size = 0x10000, scoped, tag = 'input window, operand 0, single buffered']
    #allocation3 [shape = 's32[1]{0}', space=sflag, size = 0x4, scoped, tag = 'scoped memory for vision_attention_forward.3']
    #allocation4 [shape = 'u8[98304]{0}', space=vmem, size = 0x18000, scoped, tag = 'input window, operand 1, single buffered']
    #allocation5 [shape = 's32[1]{0}', space=sflag, size = 0x4, scoped, tag = 'scoped memory for vision_attention_forward.3']
    %8 = vsyncpa [#allocation3], 0
    %9 = vsyncpa [#allocation5], 0
    // Predicated region
    $region2: #{vision_attention_forward.3} parent=1 // pred_check
      _
    $region3: #{vision_attention_forward.3} parent=1 // pred_check_branch
      %11 = sbr.rel (0) target = $region5
    $region4: #{vision_attention_forward.3} parent=1 // pred_region
      %s13 = ssub.s32 2048, 2048
      %14 = vsyncadd [#allocation3], %s13
      %s15 = sshll.u32 [#allocation2], 4
      %s16 = int_to_ptr.vmem [resolvable:$true] %s15
      %21 = dma.hbm_to_vmem [thread:$0]  %s0, 2048, %s16, [#allocation3], 128, 128, 8
    $region5: #{vision_attention_forward.3} parent=1 // pred_fallthru
      _
    // Predicated region
    $region6: #{vision_attention_forward.3} parent=1 // pred_check
      _
    $region7: #{vision_attention_forward.3} parent=1 // pred_check_branch
      %23 = sbr.rel (0) target = $region9
    $region8: #{vision_attention_forward.3} parent=1 // pred_region
      %s25 = ssub.s32 3072, 3072
      %26 = vsyncadd [#allocation5], %s25
      %s27 = sshll.u32 [#allocation4], 4
      %s28 = int_to_ptr.vmem [resolvable:$true] %s27
      %33 = dma.hbm_to_vmem [thread:$0]  %s1, 3072, %s28, [#allocation5], 192, 192, 12
    $region9: #{vision_attention_forward.3} parent=1 // pred_fallthru
      _
    // Predicated region
    $region10: #{vision_attention_forward.3} parent=1 // pred_check
      _
    $region11: #{vision_attention_forward.3} parent=1 // pred_check_branch
      %35 = sbr.rel (0) target = $region13
    $region12: #{vision_attention_forward.3} parent=1 // pred_region
      _
    $region13: #{vision_attention_forward.3} parent=1 // pred_fallthru
      _
    // Predicated region
    $region14: #{vision_attention_forward.3} parent=1 // pred_check
      _
    $region15: #{vision_attention_forward.3} parent=1 // pred_check_branch
      %37 = sbr.rel (0) target = $region17
    $region16: #{vision_attention_forward.3} parent=1 // pred_region
      %38 = dma.done [#allocation3], 2048
    $region17: #{vision_attention_forward.3} parent=1 // pred_fallthru
      _
    // Predicated region
    $region18: #{vision_attention_forward.3} parent=1 // pred_check
      _
    $region19: #{vision_attention_forward.3} parent=1 // pred_check_branch
      %40 = sbr.rel (0) target = $region21
    $region20: #{vision_attention_forward.3} parent=1 // pred_region
      %41 = dma.done [#allocation5], 3072
    $region21: #{vision_attention_forward.3} parent=1 // pred_fallthru
      _
    %v43 = vld [vmem:[#allocation2] sm:$0xff]
    %v44 = vld [vmem:[#allocation2 + $0x8] sm:$0xff]
    %v45 = vld [vmem:[#allocation2 + $0x10] sm:$0xff]
    %v46 = vld [vmem:[#allocation2 + $0x18] sm:$0xff]
    %v47 = vld [vmem:[#allocation2 + $0x20] sm:$0xff]
    %v48 = vld [vmem:[#allocation2 + $0x28] sm:$0xff]
    %v49 = vld [vmem:[#allocation2 + $0x30] sm:$0xff]
    %v50 = vld [vmem:[#allocation2 + $0x38] sm:$0xff]
    %v51 = vld [vmem:[#allocation2 + $0x40] sm:$0xff]
    %v52 = vld [vmem:[#allocation2 + $0x48] sm:$0xff]
    %v53 = vld [vmem:[#allocation2 + $0x50] sm:$0xff]
    %v54 = vld [vmem:[#allocation2 + $0x58] sm:$0xff]
    %v55 = vld [vmem:[#allocation2 + $0x60] sm:$0xff]
    %v56 = vld [vmem:[#allocation2 + $0x68] sm:$0xff]
    %v57 = vld [vmem:[#allocation2 + $0x70] sm:$0xff]
    %v58 = vld [vmem:[#allocation2 + $0x78] sm:$0xff]
    %v59 = vpack.c.bf16 %v44, %v43
    %v60 = vpack.c.bf16 %v46, %v45
    %v61 = vpack.c.bf16 %v48, %v47
    %v62 = vpack.c.bf16 %v50, %v49
    %v63 = vpack.c.bf16 %v52, %v51
    %v64 = vpack.c.bf16 %v54, %v53
    %v65 = vpack.c.bf16 %v56, %v55
    %v66 = vpack.c.bf16 %v58, %v57
    %v67 = vld [vmem:[#allocation4] sm:$0xff]
    %v68 = vld [vmem:[#allocation4 + $0x8] sm:$0xf]
    %v69 = vld [vmem:[#allocation4 + $0xc] sm:$0xff]
    %v70 = vld [vmem:[#allocation4 + $0x14] sm:$0xf]
    %v71 = vld [vmem:[#allocation4 + $0x18] sm:$0xff]
    %v72 = vld [vmem:[#allocation4 + $0x20] sm:$0xf]
    %v73 = vld [vmem:[#allocation4 + $0x24] sm:$0xff]
    %v74 = vld [vmem:[#allocation4 + $0x2c] sm:$0xf]
    %v75 = vld [vmem:[#allocation4 + $0x30] sm:$0xff]
    %v76 = vld [vmem:[#allocation4 + $0x38] sm:$0xf]
    %v77 = vld [vmem:[#allocation4 + $0x3c] sm:$0xff]
    %v78 = vld [vmem:[#allocation4 + $0x44] sm:$0xf]
    %v79 = vld [vmem:[#allocation4 + $0x48] sm:$0xff]
    %v80 = vld [vmem:[#allocation4 + $0x50] sm:$0xf]
    %v81 = vld [vmem:[#allocation4 + $0x54] sm:$0xff]
    %v82 = vld [vmem:[#allocation4 + $0x5c] sm:$0xf]
    %v83 = vld [vmem:[#allocation4 + $0x60] sm:$0xff]
    %v84 = vld [vmem:[#allocation4 + $0x68] sm:$0xf]
    %v85 = vld [vmem:[#allocation4 + $0x6c] sm:$0xff]
    %v86 = vld [vmem:[#allocation4 + $0x74] sm:$0xf]
    %v87 = vld [vmem:[#allocation4 + $0x78] sm:$0xff]
    %v88 = vld [vmem:[#allocation4 + $0x80] sm:$0xf]
    %v89 = vld [vmem:[#allocation4 + $0x84] sm:$0xff]
    %v90 = vld [vmem:[#allocation4 + $0x8c] sm:$0xf]
    %v91 = vld [vmem:[#allocation4 + $0x90] sm:$0xff]
    %v92 = vld [vmem:[#allocation4 + $0x98] sm:$0xf]
    %v93 = vld [vmem:[#allocation4 + $0x9c] sm:$0xff]
    %v94 = vld [vmem:[#allocation4 + $0xa4] sm:$0xf]
    %v95 = vld [vmem:[#allocation4 + $0xa8] sm:$0xff]
    %v96 = vld [vmem:[#allocation4 + $0xb0] sm:$0xf]
    %v97 = vld [vmem:[#allocation4 + $0xb4] sm:$0xff]
    %v98 = vld [vmem:[#allocation4 + $0xbc] sm:$0xf]
    %v99 = vld [vmem:[%s2] sm:$0x7]
    %v101 = vlaneseq
    %v102 = vshrl.u32 %v101, 7
    %v103 = vsub.s32 0, %v102
    %v104 = vrot.slane %v99, %v103
    %v105 = vlaneseq
    %v106 = vshrl.u32 %v105, 7
    %v107 = vsub.s32 1, %v106
    %v108 = vrot.slane %v99, %v107
    %v109 = vlaneseq
    %v110 = vshrl.u32 %v109, 7
    %v111 = vsub.s32 2, %v110
    %v112 = vrot.slane %v99, %v111
    %v148 = vunpack.c.l.b16 %v67
    %v149 = vunpack.c.h.b16 %v67
    %v150 = vunpack.c.l.b16 %v68
    %v151 = vunpack.c.l.b16 %v69
    %v152 = vunpack.c.h.b16 %v69
    %v153 = vunpack.c.l.b16 %v70
    %v154 = vunpack.c.l.b16 %v71
    %v155 = vunpack.c.h.b16 %v71
    %v156 = vunpack.c.l.b16 %v72
    %v157 = vunpack.c.l.b16 %v73
    %v158 = vunpack.c.h.b16 %v73
    %v159 = vunpack.c.l.b16 %v74
    %v160 = vunpack.c.l.b16 %v75
    %v161 = vunpack.c.h.b16 %v75
    %v162 = vunpack.c.l.b16 %v76
    %v163 = vunpack.c.l.b16 %v77
    %v164 = vunpack.c.h.b16 %v77
    %v165 = vunpack.c.l.b16 %v78
    %v166 = vunpack.c.l.b16 %v79
    %v167 = vunpack.c.h.b16 %v79
    %v168 = vunpack.c.l.b16 %v80
    %v169 = vunpack.c.l.b16 %v81
    %v170 = vunpack.c.h.b16 %v81
    %v171 = vunpack.c.l.b16 %v82
    %v172 = vunpack.c.l.b16 %v83
    %v173 = vunpack.c.h.b16 %v83
    %v174 = vunpack.c.l.b16 %v84
    %v175 = vunpack.c.l.b16 %v85
    %v176 = vunpack.c.h.b16 %v85
    %v177 = vunpack.c.l.b16 %v86
    %v178 = vunpack.c.l.b16 %v87
    %v179 = vunpack.c.h.b16 %v87
    %v180 = vunpack.c.l.b16 %v88
    %v181 = vunpack.c.l.b16 %v89
    %v182 = vunpack.c.h.b16 %v89
    %v183 = vunpack.c.l.b16 %v90
    %v184 = vunpack.c.l.b16 %v91
    %v185 = vunpack.c.h.b16 %v91
    %v186 = vunpack.c.l.b16 %v92
    %v187 = vunpack.c.l.b16 %v93
    %v188 = vunpack.c.h.b16 %v93
    %v189 = vunpack.c.l.b16 %v94
    %v190 = vunpack.c.l.b16 %v95
    %v191 = vunpack.c.h.b16 %v95
    %v192 = vunpack.c.l.b16 %v96
    %v193 = vunpack.c.l.b16 %v97
    %v194 = vunpack.c.h.b16 %v97
    %v195 = vunpack.c.l.b16 %v98
    %v196 = vpack.c.b16 %v151, %v148
    %v197 = vpack.c.b16 %v152, %v149
    %v198 = vpack.c.b16 %v153, %v150
    %v199 = vpack.c.b16 %v157, %v154
    %v200 = vpack.c.b16 %v158, %v155
    %v201 = vpack.c.b16 %v159, %v156
    %v202 = vpack.c.b16 %v163, %v160
    %v203 = vpack.c.b16 %v164, %v161
    %v204 = vpack.c.b16 %v165, %v162
    %v205 = vpack.c.b16 %v169, %v166
    %v206 = vpack.c.b16 %v170, %v167
    %v207 = vpack.c.b16 %v171, %v168
    %v208 = vpack.c.b16 %v175, %v172
    %v209 = vpack.c.b16 %v176, %v173
    %v210 = vpack.c.b16 %v177, %v174
    %v211 = vpack.c.b16 %v181, %v178
    %v212 = vpack.c.b16 %v182, %v179
    %v213 = vpack.c.b16 %v183, %v180
    %v214 = vpack.c.b16 %v187, %v184
    %v215 = vpack.c.b16 %v188, %v185
    %v216 = vpack.c.b16 %v189, %v186
    %v217 = vpack.c.b16 %v193, %v190
    %v218 = vpack.c.b16 %v194, %v191
    %v219 = vpack.c.b16 %v195, %v192
    %244 = vmatprep.subr.bf16.mxu0 %v197
    %245 = vmatpush1.bf16.msra.mxu0 %v196
    %246 = vmatprep.subr.bf16.mxu0 %v200
    %247 = vmatpush1.bf16.msra.mxu0 %v199
    %248 = vmatprep.subr.bf16.mxu0 %v203
    %249 = vmatpush1.bf16.msra.mxu0 %v202
    %250 = vmatprep.subr.bf16.mxu0 %v206
    %251 = vmatpush1.bf16.msra.mxu0 %v205
    %252 = vmatprep.subr.bf16.mxu0 %v209
    %253 = vmatpush1.bf16.msra.mxu0 %v208
    %254 = vmatprep.subr.bf16.mxu0 %v212
    %255 = vmatpush1.bf16.msra.mxu0 %v211
    %256 = vmatprep.subr.bf16.mxu0 %v215
    %257 = vmatpush1.bf16.msra.mxu0 %v214
    %258 = vmatprep.subr.bf16.mxu0 %v218
    %259 = vmatpush1.bf16.msra.mxu0 %v217
    %260 = vmatprep.subr.bf16.mxu0 0
    %261 = vmatpush1.bf16.msra.mxu0 0
    %262 = vmatprep.subr.bf16.mxu0 0
    %263 = vmatpush1.bf16.msra.mxu0 0
    %264 = vmatprep.subr.bf16.mxu0 0
    %265 = vmatpush1.bf16.msra.mxu0 0
    %266 = vmatprep.subr.bf16.mxu0 0
    %267 = vmatpush1.bf16.msra.mxu0 0
    %268 = vmatprep.subr.bf16.mxu0 0
    %269 = vmatpush1.bf16.msra.mxu0 0
    %270 = vmatprep.subr.bf16.mxu0 0
    %271 = vmatpush1.bf16.msra.mxu0 0
    %272 = vmatprep.subr.bf16.mxu0 0
    %273 = vmatpush1.bf16.msra.mxu0 0
    %274 = vmatprep.subr.bf16.mxu0 0
    %275 = vmatpush1.bf16.msra.mxu0 0
    %276 = vmatprep.mubr.bf16.mxu0 0
    %277 = vmatmul.mubr.bf16.gmra.mrb[0].mxu0 %v59
    %v278 = vpop.f32.mrb[0].mxu0
    %v279 = vadd.f32 %v104, %v278
    %v280 = vpop.f32.mrb[0].mxu0
    %v281 = vadd.f32 %v108, %v280
    %v282 = vpop.f32.mrb[0].mxu0
    %v283 = vadd.f32 %v104, %v282
    %v284 = vpop.f32.mrb[0].mxu0
    %v285 = vadd.f32 %v108, %v284
    %286 = vmatprep.mubr.bf16.mxu0 0
    %287 = vmatmul.mubr.bf16.gmra.mrb[0].mxu0 %v60
    %v288 = vpop.f32.mrb[0].mxu0
    %v289 = vadd.f32 %v104, %v288
    %v290 = vpop.f32.mrb[0].mxu0
    %v291 = vadd.f32 %v108, %v290
    %v292 = vpop.f32.mrb[0].mxu0
    %v293 = vadd.f32 %v104, %v292
    %v294 = vpop.f32.mrb[0].mxu0
    %v295 = vadd.f32 %v108, %v294
    %296 = vmatprep.mubr.bf16.mxu0 0
    %297 = vmatmul.mubr.bf16.gmra.mrb[0].mxu0 %v61
    %v298 = vpop.f32.mrb[0].mxu0
    %v299 = vadd.f32 %v104, %v298
    %v300 = vpop.f32.mrb[0].mxu0
    %v301 = vadd.f32 %v108, %v300
    %v302 = vpop.f32.mrb[0].mxu0
    %v303 = vadd.f32 %v104, %v302
    %v304 = vpop.f32.mrb[0].mxu0
    %v305 = vadd.f32 %v108, %v304
    %306 = vmatprep.mubr.bf16.mxu0 0
    %307 = vmatmul.mubr.bf16.gmra.mrb[0].mxu0 %v62
    %v308 = vpop.f32.mrb[0].mxu0
    %v309 = vadd.f32 %v104, %v308
    %v310 = vpop.f32.mrb[0].mxu0
    %v311 = vadd.f32 %v108, %v310
    %v312 = vpop.f32.mrb[0].mxu0
    %v313 = vadd.f32 %v104, %v312
    %v314 = vpop.f32.mrb[0].mxu0
    %v315 = vadd.f32 %v108, %v314
    %316 = vmatprep.mubr.bf16.mxu0 0
    %317 = vmatmul.mubr.bf16.gmra.mrb[0].mxu0 %v63
    %v318 = vpop.f32.mrb[0].mxu0
    %v319 = vadd.f32 %v104, %v318
    %v320 = vpop.f32.mrb[0].mxu0
    %v321 = vadd.f32 %v108, %v320
    %v322 = vpop.f32.mrb[0].mxu0
    %v323 = vadd.f32 %v104, %v322
    %v324 = vpop.f32.mrb[0].mxu0
    %v325 = vadd.f32 %v108, %v324
    %326 = vmatprep.mubr.bf16.mxu0 0
    %327 = vmatmul.mubr.bf16.gmra.mrb[0].mxu0 %v64
    %v328 = vpop.f32.mrb[0].mxu0
    %v329 = vadd.f32 %v104, %v328
    %v330 = vpop.f32.mrb[0].mxu0
    %v331 = vadd.f32 %v108, %v330
    %v332 = vpop.f32.mrb[0].mxu0
    %v333 = vadd.f32 %v104, %v332
    %v334 = vpop.f32.mrb[0].mxu0
    %v335 = vadd.f32 %v108, %v334
    %336 = vmatprep.mubr.bf16.mxu0 0
    %337 = vmatmul.mubr.bf16.gmra.mrb[0].mxu0 %v65
    %v338 = vpop.f32.mrb[0].mxu0
    %v339 = vadd.f32 %v104, %v338
    %v340 = vpop.f32.mrb[0].mxu0
    %v341 = vadd.f32 %v108, %v340
    %v342 = vpop.f32.mrb[0].mxu0
    %v343 = vadd.f32 %v104, %v342
    %v344 = vpop.f32.mrb[0].mxu0
    %v345 = vadd.f32 %v108, %v344
    %346 = vmatprep.mubr.bf16.mxu0 0
    %347 = vmatmul.mubr.bf16.gmra.mrb[0].mxu0 %v66
    %v348 = vpop.f32.mrb[0].mxu0
    %v349 = vadd.f32 %v104, %v348
    %v350 = vpop.f32.mrb[0].mxu0
    %v351 = vadd.f32 %v108, %v350
    %v352 = vpop.f32.mrb[0].mxu0
    %v353 = vadd.f32 %v104, %v352
    %v354 = vpop.f32.mrb[0].mxu0
    %v355 = vadd.f32 %v108, %v354
    %356 = vdwg.mxu0
    %357 = vmatprep.subr.bf16.mxu0 0
    %358 = vmatpush1.bf16.msra.mxu0 %v198
    %359 = vmatprep.subr.bf16.mxu0 0
    %360 = vmatpush1.bf16.msra.mxu0 %v201
    %361 = vmatprep.subr.bf16.mxu0 0
    %362 = vmatpush1.bf16.msra.mxu0 %v204
    %363 = vmatprep.subr.bf16.mxu0 0
    %364 = vmatpush1.bf16.msra.mxu0 %v207
    %365 = vmatprep.subr.bf16.mxu0 0
    %366 = vmatpush1.bf16.msra.mxu0 %v210
    %367 = vmatprep.subr.bf16.mxu0 0
    %368 = vmatpush1.bf16.msra.mxu0 %v213
    %369 = vmatprep.subr.bf16.mxu0 0
    %370 = vmatpush1.bf16.msra.mxu0 %v216
    %371 = vmatprep.subr.bf16.mxu0 0
    %372 = vmatpush1.bf16.msra.mxu0 %v219
    %373 = vmatprep.subr.bf16.mxu0 0
    %374 = vmatpush1.bf16.msra.mxu0 0
    %375 = vmatprep.subr.bf16.mxu0 0
    %376 = vmatpush1.bf16.msra.mxu0 0
    %377 = vmatprep.subr.bf16.mxu0 0
    %378 = vmatpush1.bf16.msra.mxu0 0
    %379 = vmatprep.subr.bf16.mxu0 0
    %380 = vmatpush1.bf16.msra.mxu0 0
    %381 = vmatprep.subr.bf16.mxu0 0
    %382 = vmatpush1.bf16.msra.mxu0 0
    %383 = vmatprep.subr.bf16.mxu0 0
    %384 = vmatpush1.bf16.msra.mxu0 0
    %385 = vmatprep.subr.bf16.mxu0 0
    %386 = vmatpush1.bf16.msra.mxu0 0
    %387 = vmatprep.subr.bf16.mxu0 0
    %388 = vmatpush1.bf16.msra.mxu0 0
    %389 = vmatprep.mubr.bf16.mxu0 0
    %390 = vmatmul.mubr.bf16.gmra.mrb[0].mxu0 %v59
    %v391 = vpop.f32.mrb[0].mxu0
    %v392 = vadd.f32 %v112, %v391
    %v393 = vpop.f32.mrb[0].mxu0
    %v394 = vpop.f32.mrb[0].mxu0
    %v395 = vadd.f32 %v112, %v394
    %v396 = vpop.f32.mrb[0].mxu0
    %397 = vmatprep.mubr.bf16.mxu0 0
    %398 = vmatmul.mubr.bf16.gmra.mrb[0].mxu0 %v60
    %v399 = vpop.f32.mrb[0].mxu0
    %v400 = vadd.f32 %v112, %v399
    %v401 = vpop.f32.mrb[0].mxu0
    %v402 = vpop.f32.mrb[0].mxu0
    %v403 = vadd.f32 %v112, %v402
    %v404 = vpop.f32.mrb[0].mxu0
    %405 = vmatprep.mubr.bf16.mxu0 0
    %406 = vmatmul.mubr.bf16.gmra.mrb[0].mxu0 %v61
    %v407 = vpop.f32.mrb[0].mxu0
    %v408 = vadd.f32 %v112, %v407
    %v409 = vpop.f32.mrb[0].mxu0
    %v410 = vpop.f32.mrb[0].mxu0
    %v411 = vadd.f32 %v112, %v410
    %v412 = vpop.f32.mrb[0].mxu0
    %413 = vmatprep.mubr.bf16.mxu0 0
    %414 = vmatmul.mubr.bf16.gmra.mrb[0].mxu0 %v62
    %v415 = vpop.f32.mrb[0].mxu0
    %v416 = vadd.f32 %v112, %v415
    %v417 = vpop.f32.mrb[0].mxu0
    %v418 = vpop.f32.mrb[0].mxu0
    %v419 = vadd.f32 %v112, %v418
    %v420 = vpop.f32.mrb[0].mxu0
    %421 = vmatprep.mubr.bf16.mxu0 0
    %422 = vmatmul.mubr.bf16.gmra.mrb[0].mxu0 %v63
    %v423 = vpop.f32.mrb[0].mxu0
    %v424 = vadd.f32 %v112, %v423
    %v425 = vpop.f32.mrb[0].mxu0
    %v426 = vpop.f32.mrb[0].mxu0
    %v427 = vadd.f32 %v112, %v426
    %v428 = vpop.f32.mrb[0].mxu0
    %429 = vmatprep.mubr.bf16.mxu0 0
    %430 = vmatmul.mubr.bf16.gmra.mrb[0].mxu0 %v64
    %v431 = vpop.f32.mrb[0].mxu0
    %v432 = vadd.f32 %v112, %v431
    %v433 = vpop.f32.mrb[0].mxu0
    %v434 = vpop.f32.mrb[0].mxu0
    %v435 = vadd.f32 %v112, %v434
    %v436 = vpop.f32.mrb[0].mxu0
    %437 = vmatprep.mubr.bf16.mxu0 0
    %438 = vmatmul.mubr.bf16.gmra.mrb[0].mxu0 %v65
    %v439 = vpop.f32.mrb[0].mxu0
    %v440 = vadd.f32 %v112, %v439
    %v441 = vpop.f32.mrb[0].mxu0
    %v442 = vpop.f32.mrb[0].mxu0
    %v443 = vadd.f32 %v112, %v442
    %v444 = vpop.f32.mrb[0].mxu0
    %445 = vmatprep.mubr.bf16.mxu0 0
    %446 = vmatmul.mubr.bf16.gmra.mrb[0].mxu0 %v66
    %v447 = vpop.f32.mrb[0].mxu0
    %v448 = vadd.f32 %v112, %v447
    %v449 = vpop.f32.mrb[0].mxu0
    %v450 = vpop.f32.mrb[0].mxu0
    %v451 = vadd.f32 %v112, %v450
    %v452 = vpop.f32.mrb[0].mxu0
    %453 = vdwg.mxu0
    %454 = vst [vmem:[%s3] sm:$0xff] %v279
    %455 = vst [vmem:[%s3 + $0x8] sm:$0xff] %v281
    %456 = vst [vmem:[%s3 + $0x10] sm:$0xff] %v392
    %457 = vst [vmem:[%s3 + $0x18] sm:$0xff] %v283
    %458 = vst [vmem:[%s3 + $0x20] sm:$0xff] %v285
    %459 = vst [vmem:[%s3 + $0x28] sm:$0xff] %v395
    %460 = vst [vmem:[%s3 + $0x30] sm:$0xff] %v289
    %461 = vst [vmem:[%s3 + $0x38] sm:$0xff] %v291
    %462 = vst [vmem:[%s3 + $0x40] sm:$0xff] %v400
    %463 = vst [vmem:[%s3 + $0x48] sm:$0xff] %v293
    %464 = vst [vmem:[%s3 + $0x50] sm:$0xff] %v295
    %465 = vst [vmem:[%s3 + $0x58] sm:$0xff] %v403
    %466 = vst [vmem:[%s3 + $0x60] sm:$0xff] %v299
    %467 = vst [vmem:[%s3 + $0x68] sm:$0xff] %v301
    %468 = vst [vmem:[%s3 + $0x70] sm:$0xff] %v408
    %469 = vst [vmem:[%s3 + $0x78] sm:$0xff] %v303
    %470 = vst [vmem:[%s3 + $0x80] sm:$0xff] %v305
    %471 = vst [vmem:[%s3 + $0x88] sm:$0xff] %v411
    %472 = vst [vmem:[%s3 + $0x90] sm:$0xff] %v309
    %473 = vst [vmem:[%s3 + $0x98] sm:$0xff] %v311
    %474 = vst [vmem:[%s3 + $0xa0] sm:$0xff] %v416
    %475 = vst [vmem:[%s3 + $0xa8] sm:$0xff] %v313
    %476 = vst [vmem:[%s3 + $0xb0] sm:$0xff] %v315
    %477 = vst [vmem:[%s3 + $0xb8] sm:$0xff] %v419
    %478 = vst [vmem:[%s3 + $0xc0] sm:$0xff] %v319
    %479 = vst [vmem:[%s3 + $0xc8] sm:$0xff] %v321
    %480 = vst [vmem:[%s3 + $0xd0] sm:$0xff] %v424
    %481 = vst [vmem:[%s3 + $0xd8] sm:$0xff] %v323
    %482 = vst [vmem:[%s3 + $0xe0] sm:$0xff] %v325
    %483 = vst [vmem:[%s3 + $0xe8] sm:$0xff] %v427
    %484 = vst [vmem:[%s3 + $0xf0] sm:$0xff] %v329
    %485 = vst [vmem:[%s3 + $0xf8] sm:$0xff] %v331
    %486 = vst [vmem:[%s3 + $0x100] sm:$0xff] %v432
    %487 = vst [vmem:[%s3 + $0x108] sm:$0xff] %v333
    %488 = vst [vmem:[%s3 + $0x110] sm:$0xff] %v335
    %489 = vst [vmem:[%s3 + $0x118] sm:$0xff] %v435
    %490 = vst [vmem:[%s3 + $0x120] sm:$0xff] %v339
    %491 = vst [vmem:[%s3 + $0x128] sm:$0xff] %v341
    %492 = vst [vmem:[%s3 + $0x130] sm:$0xff] %v440
    %493 = vst [vmem:[%s3 + $0x138] sm:$0xff] %v343
    %494 = vst [vmem:[%s3 + $0x140] sm:$0xff] %v345
    %495 = vst [vmem:[%s3 + $0x148] sm:$0xff] %v443
    %496 = vst [vmem:[%s3 + $0x150] sm:$0xff] %v349
    %497 = vst [vmem:[%s3 + $0x158] sm:$0xff] %v351
    %498 = vst [vmem:[%s3 + $0x160] sm:$0xff] %v448
    %499 = vst [vmem:[%s3 + $0x168] sm:$0xff] %v353
    %500 = vst [vmem:[%s3 + $0x170] sm:$0xff] %v355
    %501 = vst [vmem:[%s3 + $0x178] sm:$0xff] %v451
    // Predicated region
    $region22: #{vision_attention_forward.3} parent=1 // pred_check
      _
    $region23: #{vision_attention_forward.3} parent=1 // pred_check_branch
      %503 = sbr.rel (0) target = $region25
    $region24: #{vision_attention_forward.3} parent=1 // pred_region
      _
    $region25: #{vision_attention_forward.3} parent=1 // pred_fallthru
      _
    // Predicated region
    $region26: #{vision_attention_forward.3} parent=1 // pred_check
      _
    $region27: #{vision_attention_forward.3} parent=1 // pred_check_branch
      %505 = sbr.rel (0) target = $region29
    $region28: #{vision_attention_forward.3} parent=1 // pred_region
      _
    $region29: #{vision_attention_forward.3} parent=1 // pred_fallthru
      _
    %506 = vsyncpa [#allocation3], 1
    %507 = vsyncpa [#allocation5], 1

// kernel: vision_attention_forward.5
$region0: #{vision_attention_forward.5}
  #allocation0 [shape = 'u32[]', space=smem, size = 0x4, offset = 0x4, fixed_abs, tag = 'smem constant byte address 0x4 - core index']
  #allocation1 [shape = 'u32[144,128]{1,0:T(1,128)}', space=vmem, size = 0x12000, scoped, tag = 'internal scratch']
  %s0 = inlined_call_operand.vmem [shape: bf16[128,128], index: 0, kind: input, shape index: {}]
  %s1 = inlined_call_operand.vmem [shape: bf16[128,128], index: 1, kind: input, shape index: {}]
  %s2 = inlined_call_operand.vmem [shape: f32[1,128], index: 2, kind: input, shape index: {}]
  %s3 = inlined_call_operand.hbm [shape: f32[128,128], index: 3, kind: output, shape index: {}]
  %s4 = sld [smem:[#allocation0]]
  $region22: #{vision_attention_forward.5} parent=0
    _
  %s6 = ssub.s32 1, %s4
  %s7 = scalar_select 0, %s6, %s4
  $region1: #{vision_attention_forward.5} parent=0
    #allocation2 [shape = 'u8[65536]{0}', space=vmem, size = 0x10000, scoped, tag = 'output window, operand 0, single buffered']
    #allocation3 [shape = 's32[1]{0}', space=sflag, size = 0x4, scoped, tag = 'scoped memory for vision_attention_forward.5']
    %8 = vsyncpa [#allocation3], 0
    // Predicated region
    $region2: #{vision_attention_forward.5} parent=1 // pred_check
      _
    $region3: #{vision_attention_forward.5} parent=1 // pred_check_branch
      %10 = sbr.rel (0) target = $region5
    $region4: #{vision_attention_forward.5} parent=1 // pred_region
      _
    $region5: #{vision_attention_forward.5} parent=1 // pred_fallthru
      _
    // Predicated region
    $region6: #{vision_attention_forward.5} parent=1 // pred_check
      _
    $region7: #{vision_attention_forward.5} parent=1 // pred_check_branch
      %12 = sbr.rel (0) target = $region9
    $region8: #{vision_attention_forward.5} parent=1 // pred_region
      _
    $region9: #{vision_attention_forward.5} parent=1 // pred_fallthru
      _
    // Predicated region
    $region10: #{vision_attention_forward.5} parent=1 // pred_check
      _
    $region11: #{vision_attention_forward.5} parent=1 // pred_check_branch
      %14 = sbr.rel (0) target = $region13
    $region12: #{vision_attention_forward.5} parent=1 // pred_region
      _
    $region13: #{vision_attention_forward.5} parent=1 // pred_fallthru
      _
    %v16 = vld [vmem:[%s0] sm:$0xf]
    %v17 = vld [vmem:[%s0 + $0x4] sm:$0xf]
    %v18 = vld [vmem:[%s0 + $0x8] sm:$0xf]
    %v19 = vld [vmem:[%s0 + $0xc] sm:$0xf]
    %v20 = vld [vmem:[%s0 + $0x10] sm:$0xf]
    %v21 = vld [vmem:[%s0 + $0x14] sm:$0xf]
    %v22 = vld [vmem:[%s0 + $0x18] sm:$0xf]
    %v23 = vld [vmem:[%s0 + $0x1c] sm:$0xf]
    %v24 = vld [vmem:[%s0 + $0x20] sm:$0xf]
    %v25 = vld [vmem:[%s0 + $0x24] sm:$0xf]
    %v26 = vld [vmem:[%s0 + $0x28] sm:$0xf]
    %v27 = vld [vmem:[%s0 + $0x2c] sm:$0xf]
    %v28 = vld [vmem:[%s0 + $0x30] sm:$0xf]
    %v29 = vld [vmem:[%s0 + $0x34] sm:$0xf]
    %v30 = vld [vmem:[%s0 + $0x38] sm:$0xf]
    %v31 = vld [vmem:[%s0 + $0x3c] sm:$0xf]
    %v32 = vld [vmem:[%s1] sm:$0xf]
    %v33 = vld [vmem:[%s1 + $0x4] sm:$0xf]
    %v34 = vld [vmem:[%s1 + $0x8] sm:$0xf]
    %v35 = vld [vmem:[%s1 + $0xc] sm:$0xf]
    %v36 = vld [vmem:[%s1 + $0x10] sm:$0xf]
    %v37 = vld [vmem:[%s1 + $0x14] sm:$0xf]
    %v38 = vld [vmem:[%s1 + $0x18] sm:$0xf]
    %v39 = vld [vmem:[%s1 + $0x1c] sm:$0xf]
    %v40 = vld [vmem:[%s1 + $0x20] sm:$0xf]
    %v41 = vld [vmem:[%s1 + $0x24] sm:$0xf]
    %v42 = vld [vmem:[%s1 + $0x28] sm:$0xf]
    %v43 = vld [vmem:[%s1 + $0x2c] sm:$0xf]
    %v44 = vld [vmem:[%s1 + $0x30] sm:$0xf]
    %v45 = vld [vmem:[%s1 + $0x34] sm:$0xf]
    %v46 = vld [vmem:[%s1 + $0x38] sm:$0xf]
    %v47 = vld [vmem:[%s1 + $0x3c] sm:$0xf]
    %v48 = vld [vmem:[%s2] sm:$0x1]
    %v50 = vlaneseq
    %v51 = vshrl.u32 %v50, 7
    %v52 = vsub.s32 0, %v51
    %v53 = vrot.slane %v48, %v52
    %v71 = vunpack.c.l.b16 %v16
    %v72 = vunpack.c.l.b16 %v17
    %v73 = vunpack.c.l.b16 %v18
    %v74 = vunpack.c.l.b16 %v19
    %v75 = vunpack.c.l.b16 %v20
    %v76 = vunpack.c.l.b16 %v21
    %v77 = vunpack.c.l.b16 %v22
    %v78 = vunpack.c.l.b16 %v23
    %v79 = vunpack.c.l.b16 %v24
    %v80 = vunpack.c.l.b16 %v25
    %v81 = vunpack.c.l.b16 %v26
    %v82 = vunpack.c.l.b16 %v27
    %v83 = vunpack.c.l.b16 %v28
    %v84 = vunpack.c.l.b16 %v29
    %v85 = vunpack.c.l.b16 %v30
    %v86 = vunpack.c.l.b16 %v31
    %v87 = vpack.c.b16 %v72, %v71
    %v88 = vpack.c.b16 %v74, %v73
    %v89 = vpack.c.b16 %v76, %v75
    %v90 = vpack.c.b16 %v78, %v77
    %v91 = vpack.c.b16 %v80, %v79
    %v92 = vpack.c.b16 %v82, %v81
    %v93 = vpack.c.b16 %v84, %v83
    %v94 = vpack.c.b16 %v86, %v85
    %v119 = vunpack.c.l.b16 %v32
    %v120 = vunpack.c.l.b16 %v33
    %v121 = vunpack.c.l.b16 %v34
    %v122 = vunpack.c.l.b16 %v35
    %v123 = vunpack.c.l.b16 %v36
    %v124 = vunpack.c.l.b16 %v37
    %v125 = vunpack.c.l.b16 %v38
    %v126 = vunpack.c.l.b16 %v39
    %v127 = vunpack.c.l.b16 %v40
    %v128 = vunpack.c.l.b16 %v41
    %v129 = vunpack.c.l.b16 %v42
    %v130 = vunpack.c.l.b16 %v43
    %v131 = vunpack.c.l.b16 %v44
    %v132 = vunpack.c.l.b16 %v45
    %v133 = vunpack.c.l.b16 %v46
    %v134 = vunpack.c.l.b16 %v47
    %v135 = vpack.c.b16 %v120, %v119
    %v136 = vpack.c.b16 %v122, %v121
    %v137 = vpack.c.b16 %v124, %v123
    %v138 = vpack.c.b16 %v126, %v125
    %v139 = vpack.c.b16 %v128, %v127
    %v140 = vpack.c.b16 %v130, %v129
    %v141 = vpack.c.b16 %v132, %v131
    %v142 = vpack.c.b16 %v134, %v133
    %151 = vmatprep.subr.bf16.mxu0 0
    %152 = vmatpush1.bf16.msra.mxu0 %v135
    %153 = vmatprep.subr.bf16.mxu0 0
    %154 = vmatpush1.bf16.msra.mxu0 %v136
    %155 = vmatprep.subr.bf16.mxu0 0
    %156 = vmatpush1.bf16.msra.mxu0 %v137
    %157 = vmatprep.subr.bf16.mxu0 0
    %158 = vmatpush1.bf16.msra.mxu0 %v138
    %159 = vmatprep.subr.bf16.mxu0 0
    %160 = vmatpush1.bf16.msra.mxu0 %v139
    %161 = vmatprep.subr.bf16.mxu0 0
    %162 = vmatpush1.bf16.msra.mxu0 %v140
    %163 = vmatprep.subr.bf16.mxu0 0
    %164 = vmatpush1.bf16.msra.mxu0 %v141
    %165 = vmatprep.subr.bf16.mxu0 0
    %166 = vmatpush1.bf16.msra.mxu0 %v142
    %167 = vmatprep.subr.bf16.mxu0 0
    %168 = vmatpush1.bf16.msra.mxu0 0
    %169 = vmatprep.subr.bf16.mxu0 0
    %170 = vmatpush1.bf16.msra.mxu0 0
    %171 = vmatprep.subr.bf16.mxu0 0
    %172 = vmatpush1.bf16.msra.mxu0 0
    %173 = vmatprep.subr.bf16.mxu0 0
    %174 = vmatpush1.bf16.msra.mxu0 0
    %175 = vmatprep.subr.bf16.mxu0 0
    %176 = vmatpush1.bf16.msra.mxu0 0
    %177 = vmatprep.subr.bf16.mxu0 0
    %178 = vmatpush1.bf16.msra.mxu0 0
    %179 = vmatprep.subr.bf16.mxu0 0
    %180 = vmatpush1.bf16.msra.mxu0 0
    %181 = vmatprep.subr.bf16.mxu0 0
    %182 = vmatpush1.bf16.msra.mxu0 0
    %183 = vmatprep.mubr.bf16.mxu0 0
    %184 = vmatmul.mubr.bf16.gmra.mrb[0].mxu0 %v87
    %v185 = vpop.f32.mrb[0].mxu0
    %v186 = vadd.f32 %v53, %v185
    %v187 = vpop.f32.mrb[0].mxu0
    %v188 = vpop.f32.mrb[0].mxu0
    %v189 = vadd.f32 %v53, %v188
    %v190 = vpop.f32.mrb[0].mxu0
    %191 = vmatprep.mubr.bf16.mxu0 0
    %192 = vmatmul.mubr.bf16.gmra.mrb[0].mxu0 %v88
    %v193 = vpop.f32.mrb[0].mxu0
    %v194 = vadd.f32 %v53, %v193
    %v195 = vpop.f32.mrb[0].mxu0
    %v196 = vpop.f32.mrb[0].mxu0
    %v197 = vadd.f32 %v53, %v196
    %v198 = vpop.f32.mrb[0].mxu0
    %199 = vmatprep.mubr.bf16.mxu0 0
    %200 = vmatmul.mubr.bf16.gmra.mrb[0].mxu0 %v89
    %v201 = vpop.f32.mrb[0].mxu0
    %v202 = vadd.f32 %v53, %v201
    %v203 = vpop.f32.mrb[0].mxu0
    %v204 = vpop.f32.mrb[0].mxu0
    %v205 = vadd.f32 %v53, %v204
    %v206 = vpop.f32.mrb[0].mxu0
    %207 = vmatprep.mubr.bf16.mxu0 0
    %208 = vmatmul.mubr.bf16.gmra.mrb[0].mxu0 %v90
    %v209 = vpop.f32.mrb[0].mxu0
    %v210 = vadd.f32 %v53, %v209
    %v211 = vpop.f32.mrb[0].mxu0
    %v212 = vpop.f32.mrb[0].mxu0
    %v213 = vadd.f32 %v53, %v212
    %v214 = vpop.f32.mrb[0].mxu0
    %215 = vmatprep.mubr.bf16.mxu0 0
    %216 = vmatmul.mubr.bf16.gmra.mrb[0].mxu0 %v91
    %v217 = vpop.f32.mrb[0].mxu0
    %v218 = vadd.f32 %v53, %v217
    %v219 = vpop.f32.mrb[0].mxu0
    %v220 = vpop.f32.mrb[0].mxu0
    %v221 = vadd.f32 %v53, %v220
    %v222 = vpop.f32.mrb[0].mxu0
    %223 = vmatprep.mubr.bf16.mxu0 0
    %224 = vmatmul.mubr.bf16.gmra.mrb[0].mxu0 %v92
    %v225 = vpop.f32.mrb[0].mxu0
    %v226 = vadd.f32 %v53, %v225
    %v227 = vpop.f32.mrb[0].mxu0
    %v228 = vpop.f32.mrb[0].mxu0
    %v229 = vadd.f32 %v53, %v228
    %v230 = vpop.f32.mrb[0].mxu0
    %231 = vmatprep.mubr.bf16.mxu0 0
    %232 = vmatmul.mubr.bf16.gmra.mrb[0].mxu0 %v93
    %v233 = vpop.f32.mrb[0].mxu0
    %v234 = vadd.f32 %v53, %v233
    %v235 = vpop.f32.mrb[0].mxu0
    %v236 = vpop.f32.mrb[0].mxu0
    %v237 = vadd.f32 %v53, %v236
    %v238 = vpop.f32.mrb[0].mxu0
    %239 = vmatprep.mubr.bf16.mxu0 0
    %240 = vmatmul.mubr.bf16.gmra.mrb[0].mxu0 %v94
    %v241 = vpop.f32.mrb[0].mxu0
    %v242 = vadd.f32 %v53, %v241
    %v243 = vpop.f32.mrb[0].mxu0
    %v244 = vpop.f32.mrb[0].mxu0
    %v245 = vadd.f32 %v53, %v244
    %v246 = vpop.f32.mrb[0].mxu0
    %247 = vdwg.mxu0
    %248 = vst [vmem:[#allocation2] sm:$0xff] %v186
    %249 = vst [vmem:[#allocation2 + $0x8] sm:$0xff] %v189
    %250 = vst [vmem:[#allocation2 + $0x10] sm:$0xff] %v194
    %251 = vst [vmem:[#allocation2 + $0x18] sm:$0xff] %v197
    %252 = vst [vmem:[#allocation2 + $0x20] sm:$0xff] %v202
    %253 = vst [vmem:[#allocation2 + $0x28] sm:$0xff] %v205
    %254 = vst [vmem:[#allocation2 + $0x30] sm:$0xff] %v210
    %255 = vst [vmem:[#allocation2 + $0x38] sm:$0xff] %v213
    %256 = vst [vmem:[#allocation2 + $0x40] sm:$0xff] %v218
    %257 = vst [vmem:[#allocation2 + $0x48] sm:$0xff] %v221
    %258 = vst [vmem:[#allocation2 + $0x50] sm:$0xff] %v226
    %259 = vst [vmem:[#allocation2 + $0x58] sm:$0xff] %v229
    %260 = vst [vmem:[#allocation2 + $0x60] sm:$0xff] %v234
    %261 = vst [vmem:[#allocation2 + $0x68] sm:$0xff] %v237
    %262 = vst [vmem:[#allocation2 + $0x70] sm:$0xff] %v242
    %263 = vst [vmem:[#allocation2 + $0x78] sm:$0xff] %v245
    // Predicated region
    $region14: #{vision_attention_forward.5} parent=1 // pred_check
      _
    $region15: #{vision_attention_forward.5} parent=1 // pred_check_branch
      %265 = sbr.rel (0) target = $region17
    $region16: #{vision_attention_forward.5} parent=1 // pred_region
      %s267 = ssub.s32 2048, 2048
      %268 = vsyncadd [#allocation3], %s267
      %s269 = sshll.u32 [#allocation2], 4
      %s270 = int_to_ptr.vmem [resolvable:$true] %s269
      %275 = dma.vmem_to_hbm [thread:$0]  %s270, 2048, %s3, [#allocation3], 128, 128, 8
    $region17: #{vision_attention_forward.5} parent=1 // pred_fallthru
      _
    // Predicated region
    $region18: #{vision_attention_forward.5} parent=1 // pred_check
      _
    $region19: #{vision_attention_forward.5} parent=1 // pred_check_branch
      %277 = sbr.rel (0) target = $region21
    $region20: #{vision_attention_forward.5} parent=1 // pred_region
      %278 = dma.done [#allocation3], 2048
    $region21: #{vision_attention_forward.5} parent=1 // pred_fallthru
      _
    %279 = vsyncpa [#allocation3], 1

// kernel: vision_attention_forward.4
$region0: #{vision_attention_forward.4}
  #allocation0 [shape = 'u32[]', space=smem, size = 0x4, offset = 0x4, fixed_abs, tag = 'smem constant byte address 0x4 - core index']
  #allocation1 [shape = 'u32[144,128]{1,0:T(1,128)}', space=vmem, size = 0x12000, scoped, tag = 'internal scratch']
  #allocation2 [shape = 'f32[128,1]{1,0:T(8,128)}', space=vmem, size = 0x10000, scoped, tag = 'scratch operand']
  #allocation3 [shape = 'f32[128,1]{1,0:T(8,128)}', space=vmem, size = 0x10000, scoped, tag = 'scratch operand']
  #allocation4 [shape = 'f32[128,32]{1,0:T(8,128)}', space=vmem, size = 0x10000, scoped, tag = 'scratch operand']
  #allocation5 [shape = 's32[1]{0}', space=sflag, size = 0x4, scoped, tag = 'scoped memory for vision_attention_forward.4']
  #allocation6 [shape = 's32[1,1]{1,0:T(1,128)S(6)}', space=smem, size = 0x200, scoped, tag = 'prefetched SMEM operand 0']
  %s0 = inlined_call_operand.<no memory space> [shape: s32[1,1], index: 0, kind: input, shape index: {}]
  %s1 = inlined_call_operand.vmem [shape: bf16[4,128,32], index: 1, kind: input, shape index: {}]
  %s2 = inlined_call_operand.vmem [shape: bf16[4,128,32], index: 2, kind: input, shape index: {}]
  %s3 = inlined_call_operand.vmem [shape: bf16[4,128,32], index: 3, kind: input, shape index: {}]
  %s4 = inlined_call_operand.vmem [shape: s32[128,1], index: 4, kind: input, shape index: {}]
  %s5 = inlined_call_operand.vmem [shape: s32[1,128], index: 5, kind: input, shape index: {}]
  %s6 = inlined_call_operand.vmem [shape: bf16[4,128,32], index: 6, kind: output, shape index: {}]
  %s7 = sld [smem:[#allocation0]]
  $region65: #{vision_attention_forward.4} parent=0
    _
  %s9 = ssub.s32 1, %s7
  %s10 = scalar_select 0, %s9, %s7
  %11 = sst [smem:[#allocation6]] %s0
  loop: start=0, step=1, limit=6
  $region2: #{vision_attention_forward.4} parent=0 // loop_pre_header
    _
  $region3: #{vision_attention_forward.4} parent=0 // loop_header
    %s13 = sphi 0, %s17
    %p14 = scmp.ge.s32.totalorder %s13, 6
    %s20 = sphi 0, %s39
    %s21 = sphi 0, %s35
    %s22 = sphi 0, %s31
    %s23 = sphi 0, %s20
    %s24 = sphi 0, %s21
    %s25 = sphi 0, %s22
    %s26 = sphi 0, %s23
    %s27 = sphi 0, %s24
    %s28 = sphi 0, %s25
    %s44 = sphi 0, %s46
    %s47 = sphi 0, %s44
    %s48 = sphi 0, %s47
    %s64 = sphi 0, %s48
    %s72 = sphi 0, %s74
    %s75 = sphi 0, %s72
    %s76 = sphi 0, %s75
    %s92 = sphi 0, %s76
    %s100 = sphi 0, %s102
    %s103 = sphi 0, %s100
    %s104 = sphi 0, %s103
    %s120 = sphi 0, %s104
    %s126 = sphi 0, %s128
    %s129 = sphi 0, %s126
    %s130 = sphi 0, %s129
    %s146 = sphi 0, %s130
    %s152 = sphi 0, %s154
    %s155 = sphi 0, %s152
    %s156 = sphi 0, %s155
    %s172 = sphi 0, %s156
    %s180 = sphi 0, %s182
    %s183 = sphi 0, %s180
    %s184 = sphi 0, %s183
    %s200 = sphi 0, %s184
  $region4: #{vision_attention_forward.4} parent=0 // loop_header_branch
    %16 = sbr.rel (%p14) target = $region8
  $region5: #{vision_attention_forward.4} parent=0 // loop_body
    %s18 = ssub.s32 %s13, 1
    %s19 = ssub.s32 %s13, 2
    %s29 = sadd.s32 1, %s22
    %p30 = scmp.ge.s32.totalorder %s29, 1
    %s31 = scalar_select %p30, 0, %s29
    %s32 = sadd.s32 1, %s21
    %s33 = scalar_select %p30, %s32, %s21
    %p34 = scmp.ge.s32.totalorder %s33, 1
    %s35 = scalar_select %p34, 0, %s33
    %s36 = sadd.s32 1, %s20
    %s37 = scalar_select %p34, %s36, %s20
    %p38 = scmp.ge.s32.totalorder %s37, 4
    %s39 = scalar_select %p38, 0, %s37
    %s40 = ssub.s32 %s20, %s39
    %s41 = ssub.s32 %s21, %s35
    %s42 = sor.u32 %s40, %s41
    %p43 = scmp.eq.s32.totalorder %s42, 0
    %s45 = sadd.s32 %s44, 1
    %s46 = scalar_select %p43, %s44, %s45
    %p49 = pneg %p43
    %p50 = scmp.eq.s32.totalorder %s13, 3
    %p51 = por %p49, %p50
    %p52 = scmp.ne.s32.totalorder %s44, %s47
    %p53 = scmp.eq.s32.totalorder %s13, 0
    %p54 = por %p52, %p53
    %p55 = scmp.ne.s32.totalorder %s44, %s47
    %p56 = scmp.eq.s32.totalorder %s18, 3
    %p57 = por %p55, %p56
    %p58 = scmp.ne.s32.totalorder %s47, %s48
    %p59 = scmp.eq.s32.totalorder %s18, 0
    %p60 = por %p58, %p59
    %p61 = scmp.ne.s32.totalorder %s47, %s48
    %p62 = scmp.eq.s32.totalorder %s19, 3
    %p63 = por %p61, %p62
    %p65 = scmp.ne.s32.totalorder %s48, %s64
    %p66 = scmp.eq.s32.totalorder %s19, 0
    %p67 = por %p65, %p66
    %s68 = ssub.s32 %s20, %s39
    %s69 = ssub.s32 %s22, %s31
    %s70 = sor.u32 %s68, %s69
    %p71 = scmp.eq.s32.totalorder %s70, 0
    %s73 = sadd.s32 %s72, 1
    %s74 = scalar_select %p71, %s72, %s73
    %p77 = pneg %p71
    %p78 = scmp.eq.s32.totalorder %s13, 3
    %p79 = por %p77, %p78
    %p80 = scmp.ne.s32.totalorder %s72, %s75
    %p81 = scmp.eq.s32.totalorder %s13, 0
    %p82 = por %p80, %p81
    %p83 = scmp.ne.s32.totalorder %s72, %s75
    %p84 = scmp.eq.s32.totalorder %s18, 3
    %p85 = por %p83, %p84
    %p86 = scmp.ne.s32.totalorder %s75, %s76
    %p87 = scmp.eq.s32.totalorder %s18, 0
    %p88 = por %p86, %p87
    %p89 = scmp.ne.s32.totalorder %s75, %s76
    %p90 = scmp.eq.s32.totalorder %s19, 3
    %p91 = por %p89, %p90
    %p93 = scmp.ne.s32.totalorder %s76, %s92
    %p94 = scmp.eq.s32.totalorder %s19, 0
    %p95 = por %p93, %p94
    %s96 = ssub.s32 %s20, %s39
    %s97 = ssub.s32 %s22, %s31
    %s98 = sor.u32 %s96, %s97
    %p99 = scmp.eq.s32.totalorder %s98, 0
    %s101 = sadd.s32 %s100, 1
    %s102 = scalar_select %p99, %s100, %s101
    %p105 = pneg %p99
    %p106 = scmp.eq.s32.totalorder %s13, 3
    %p107 = por %p105, %p106
    %p108 = scmp.ne.s32.totalorder %s100, %s103
    %p109 = scmp.eq.s32.totalorder %s13, 0
    %p110 = por %p108, %p109
    %p111 = scmp.ne.s32.totalorder %s100, %s103
    %p112 = scmp.eq.s32.totalorder %s18, 3
    %p113 = por %p111, %p112
    %p114 = scmp.ne.s32.totalorder %s103, %s104
    %p115 = scmp.eq.s32.totalorder %s18, 0
    %p116 = por %p114, %p115
    %p117 = scmp.ne.s32.totalorder %s103, %s104
    %p118 = scmp.eq.s32.totalorder %s19, 3
    %p119 = por %p117, %p118
    %p121 = scmp.ne.s32.totalorder %s104, %s120
    %p122 = scmp.eq.s32.totalorder %s19, 0
    %p123 = por %p121, %p122
    %s124 = ssub.s32 %s21, %s35
    %p125 = scmp.eq.s32.totalorder %s124, 0
    %s127 = sadd.s32 %s126, 1
    %s128 = scalar_select %p125, %s126, %s127
    %p131 = pneg %p125
    %p132 = scmp.eq.s32.totalorder %s13, 3
    %p133 = por %p131, %p132
    %p134 = scmp.ne.s32.totalorder %s126, %s129
    %p135 = scmp.eq.s32.totalorder %s13, 0
    %p136 = por %p134, %p135
    %p137 = scmp.ne.s32.totalorder %s126, %s129
    %p138 = scmp.eq.s32.totalorder %s18, 3
    %p139 = por %p137, %p138
    %p140 = scmp.ne.s32.totalorder %s129, %s130
    %p141 = scmp.eq.s32.totalorder %s18, 0
    %p142 = por %p140, %p141
    %p143 = scmp.ne.s32.totalorder %s129, %s130
    %p144 = scmp.eq.s32.totalorder %s19, 3
    %p145 = por %p143, %p144
    %p147 = scmp.ne.s32.totalorder %s130, %s146
    %p148 = scmp.eq.s32.totalorder %s19, 0
    %p149 = por %p147, %p148
    %s150 = ssub.s32 %s22, %s31
    %p151 = scmp.eq.s32.totalorder %s150, 0
    %s153 = sadd.s32 %s152, 1
    %s154 = scalar_select %p151, %s152, %s153
    %p157 = pneg %p151
    %p158 = scmp.eq.s32.totalorder %s13, 3
    %p159 = por %p157, %p158
    %p160 = scmp.ne.s32.totalorder %s152, %s155
    %p161 = scmp.eq.s32.totalorder %s13, 0
    %p162 = por %p160, %p161
    %p163 = scmp.ne.s32.totalorder %s152, %s155
    %p164 = scmp.eq.s32.totalorder %s18, 3
    %p165 = por %p163, %p164
    %p166 = scmp.ne.s32.totalorder %s155, %s156
    %p167 = scmp.eq.s32.totalorder %s18, 0
    %p168 = por %p166, %p167
    %p169 = scmp.ne.s32.totalorder %s155, %s156
    %p170 = scmp.eq.s32.totalorder %s19, 3
    %p171 = por %p169, %p170
    %p173 = scmp.ne.s32.totalorder %s156, %s172
    %p174 = scmp.eq.s32.totalorder %s19, 0
    %p175 = por %p173, %p174
    %s176 = ssub.s32 %s20, %s39
    %s177 = ssub.s32 %s21, %s35
    %s178 = sor.u32 %s176, %s177
    %p179 = scmp.eq.s32.totalorder %s178, 0
    %s181 = sadd.s32 %s180, 1
    %s182 = scalar_select %p179, %s180, %s181
    %p185 = pneg %p179
    %p186 = scmp.eq.s32.totalorder %s13, 3
    %p187 = por %p185, %p186
    %p188 = scmp.ne.s32.totalorder %s180, %s183
    %p189 = scmp.eq.s32.totalorder %s13, 0
    %p190 = por %p188, %p189
    %p191 = scmp.ne.s32.totalorder %s180, %s183
    %p192 = scmp.eq.s32.totalorder %s18, 3
    %p193 = por %p191, %p192
    %p194 = scmp.ne.s32.totalorder %s183, %s184
    %p195 = scmp.eq.s32.totalorder %s18, 0
    %p196 = por %p194, %p195
    %p197 = scmp.ne.s32.totalorder %s183, %s184
    %p198 = scmp.eq.s32.totalorder %s19, 3
    %p199 = por %p197, %p198
    %p201 = scmp.ne.s32.totalorder %s184, %s200
    %p202 = scmp.eq.s32.totalorder %s19, 0
    %p203 = por %p201, %p202
    %p204 = scmp.le.s32.totalorder 1, %s13
    %p205 = scmp.lt.s32.totalorder %s13, 5
    %p206 = pnand %p204, %p205
    %p207 = pneg %p206
    // Predicated region
    $region9: #{vision_attention_forward.4} parent=5 // pred_check
      _
    $region10: #{vision_attention_forward.4} parent=5 // pred_check_branch
      %209 = sbr.rel (%p206) target = $region12
    $region11: #{vision_attention_forward.4} parent=5 // pred_region
      %s210 = ssub.s32 %s13, 1
      // Predicated region
      $region13: #{vision_attention_forward.4} parent=11 // pred_check
        %p211 = pneg %p142
      $region14: #{vision_attention_forward.4} parent=11 // pred_check_branch
        %213 = sbr.rel (%p211) target = $region16
      $region15: #{vision_attention_forward.4} parent=11 // pred_region
        %s214 = smul.u32 16, %s24
        %p215 = scmp.lt.s32.totalorder %s214, 15
        %s216 = scalar_select %p215, %s214, 15
        %s217 = smul.addr %s216, 8
        %s218 = scalar_lea.vmem %s4, %s217
        %s219 = smul.u32 16, %s24
      $region16: #{vision_attention_forward.4} parent=11 // pred_fallthru
        _
      // Predicated region
      $region17: #{vision_attention_forward.4} parent=11 // pred_check
        %p220 = pneg %p168
      $region18: #{vision_attention_forward.4} parent=11 // pred_check_branch
        %222 = sbr.rel (%p220) target = $region20
      $region19: #{vision_attention_forward.4} parent=11 // pred_region
        %p223 = scmp.lt.s32.totalorder %s25, 0
        %s224 = scalar_select %p223, %s25, 0
        %s225 = scalar_lea.vmem %s5, %s224
      $region20: #{vision_attention_forward.4} parent=11 // pred_fallthru
        _
    $region12: #{vision_attention_forward.4} parent=5 // pred_fallthru
      _
    %p226 = scmp.lt.s32.totalorder %s13, 4
    // Predicated region
    $region21: #{vision_attention_forward.4} parent=5 // pred_check
      %p227 = pneg %p226
    $region22: #{vision_attention_forward.4} parent=5 // pred_check_branch
      %229 = sbr.rel (%p227) target = $region24
    $region23: #{vision_attention_forward.4} parent=5 // pred_region
      // Predicated region
      $region25: #{vision_attention_forward.4} parent=23 // pred_check
        %p230 = pneg %p54
      $region26: #{vision_attention_forward.4} parent=23 // pred_check_branch
        %232 = sbr.rel (%p230) target = $region28
      $region27: #{vision_attention_forward.4} parent=23 // pred_region
        %s233 = smul.u32 16, %s21
        %p234 = scmp.lt.s32.totalorder %s20, 3
        %s235 = scalar_select %p234, %s20, 3
        %p236 = scmp.lt.s32.totalorder %s233, 15
        %s237 = scalar_select %p236, %s233, 15
        %s238 = smul.addr %s235, 16
        %s239 = sadd.s32 %s237, %s238
        %s240 = smul.addr %s239, 4
        %s241 = scalar_lea.vmem %s1, %s240
        %s242 = smul.u32 16, %s21
      $region28: #{vision_attention_forward.4} parent=23 // pred_fallthru
        _
      // Predicated region
      $region29: #{vision_attention_forward.4} parent=23 // pred_check
        %p243 = pneg %p82
      $region30: #{vision_attention_forward.4} parent=23 // pred_check_branch
        %245 = sbr.rel (%p243) target = $region32
      $region31: #{vision_attention_forward.4} parent=23 // pred_region
        %s246 = smul.u32 16, %s22
        %p247 = scmp.lt.s32.totalorder %s20, 3
        %s248 = scalar_select %p247, %s20, 3
        %p249 = scmp.lt.s32.totalorder %s246, 15
        %s250 = scalar_select %p249, %s246, 15
        %s251 = smul.addr %s248, 16
        %s252 = sadd.s32 %s250, %s251
        %s253 = smul.addr %s252, 4
        %s254 = scalar_lea.vmem %s2, %s253
        %s255 = smul.u32 16, %s22
      $region32: #{vision_attention_forward.4} parent=23 // pred_fallthru
        _
      // Predicated region
      $region33: #{vision_attention_forward.4} parent=23 // pred_check
        %p256 = pneg %p110
      $region34: #{vision_attention_forward.4} parent=23 // pred_check_branch
        %258 = sbr.rel (%p256) target = $region36
      $region35: #{vision_attention_forward.4} parent=23 // pred_region
        %s259 = smul.u32 16, %s22
        %p260 = scmp.lt.s32.totalorder %s20, 3
        %s261 = scalar_select %p260, %s20, 3
        %p262 = scmp.lt.s32.totalorder %s259, 15
        %s263 = scalar_select %p262, %s259, 15
        %s264 = smul.addr %s261, 16
        %s265 = sadd.s32 %s263, %s264
        %s266 = smul.addr %s265, 4
        %s267 = scalar_lea.vmem %s3, %s266
        %s268 = smul.u32 16, %s22
      $region36: #{vision_attention_forward.4} parent=23 // pred_fallthru
        _
    $region24: #{vision_attention_forward.4} parent=5 // pred_fallthru
      _
    %p269 = scmp.le.s32.totalorder 1, %s13
    %p270 = scmp.lt.s32.totalorder %s13, 5
    %p271 = pnand %p269, %p270
    %p272 = pneg %p271
    // Predicated region
    $region37: #{vision_attention_forward.4} parent=5 // pred_check
      _
    $region38: #{vision_attention_forward.4} parent=5 // pred_check_branch
      %274 = sbr.rel (%p271) target = $region40
    $region39: #{vision_attention_forward.4} parent=5 // pred_region
      %s275 = ssub.s32 %s13, 1
      %s276 = smul.u32 16, %s24
      %p277 = scmp.lt.s32.totalorder %s23, 3
      %s278 = scalar_select %p277, %s23, 3
      %p279 = scmp.lt.s32.totalorder %s276, 15
      %s280 = scalar_select %p279, %s276, 15
      %s281 = smul.addr %s278, 16
      %s282 = sadd.s32 %s280, %s281
      %s283 = smul.addr %s282, 4
      %s284 = scalar_lea.vmem %s1, %s283
      %p285 = pneg %p60
      %p286 = pneg %p57
      %s287 = smul.u32 16, %s25
      %p288 = scmp.lt.s32.totalorder %s23, 3
      %s289 = scalar_select %p288, %s23, 3
      %p290 = scmp.lt.s32.totalorder %s287, 15
      %s291 = scalar_select %p290, %s287, 15
      %s292 = smul.addr %s289, 16
      %s293 = sadd.s32 %s291, %s292
      %s294 = smul.addr %s293, 4
      %s295 = scalar_lea.vmem %s2, %s294
      %p296 = pneg %p88
      %p297 = pneg %p85
      %s298 = smul.u32 16, %s25
      %p299 = scmp.lt.s32.totalorder %s23, 3
      %s300 = scalar_select %p299, %s23, 3
      %p301 = scmp.lt.s32.totalorder %s298, 15
      %s302 = scalar_select %p301, %s298, 15
      %s303 = smul.addr %s300, 16
      %s304 = sadd.s32 %s302, %s303
      %s305 = smul.addr %s304, 4
      %s306 = scalar_lea.vmem %s3, %s305
      %p307 = pneg %p116
      %p308 = pneg %p113
      %s309 = smul.u32 16, %s24
      %p310 = scmp.lt.s32.totalorder %s309, 15
      %s311 = scalar_select %p310, %s309, 15
      %s312 = smul.addr %s311, 8
      %s313 = scalar_lea.vmem %s4, %s312
      %p314 = pneg %p142
      %p315 = pneg %p139
      %p316 = scmp.lt.s32.totalorder %s25, 0
      %s317 = scalar_select %p316, %s25, 0
      %s318 = scalar_lea.vmem %s5, %s317
      %p319 = pneg %p168
      %p320 = pneg %p165
      %p321 = pneg %p196
      %p322 = pneg %p193
      %s323 = smul.u32 16, %s24
      %p324 = scmp.lt.s32.totalorder %s23, 3
      %s325 = scalar_select %p324, %s23, 3
      %p326 = scmp.lt.s32.totalorder %s323, 15
      %s327 = scalar_select %p326, %s323, 15
      %s328 = smul.addr %s325, 16
      %s329 = sadd.s32 %s327, %s328
      %s330 = smul.addr %s329, 4
      %s331 = scalar_lea.vmem %s6, %s330
      %s332 = smul.u32 16, %s24
      %p333 = scmp.lt.s32.totalorder %s23, 3
      %s334 = scalar_select %p333, %s23, 3
      %p335 = scmp.lt.s32.totalorder %s332, 15
      %s336 = scalar_select %p335, %s332, 15
      %s337 = smul.addr %s334, 16
      %s338 = sadd.s32 %s336, %s337
      %s339 = smul.addr %s338, 4
      %s340 = scalar_lea.vmem %s1, %s339
      %s341 = smul.u32 16, %s24
      %s342 = smul.u32 16, %s25
      %p343 = scmp.lt.s32.totalorder %s23, 3
      %s344 = scalar_select %p343, %s23, 3
      %p345 = scmp.lt.s32.totalorder %s342, 15
      %s346 = scalar_select %p345, %s342, 15
      %s347 = smul.addr %s344, 16
      %s348 = sadd.s32 %s346, %s347
      %s349 = smul.addr %s348, 4
      %s350 = scalar_lea.vmem %s2, %s349
      %s351 = smul.u32 16, %s25
      %s352 = smul.u32 16, %s25
      %p353 = scmp.lt.s32.totalorder %s23, 3
      %s354 = scalar_select %p353, %s23, 3
      %p355 = scmp.lt.s32.totalorder %s352, 15
      %s356 = scalar_select %p355, %s352, 15
      %s357 = smul.addr %s354, 16
      %s358 = sadd.s32 %s356, %s357
      %s359 = smul.addr %s358, 4
      %s360 = scalar_lea.vmem %s3, %s359
      %s361 = smul.u32 16, %s25
      %s362 = smul.u32 16, %s24
      %p363 = scmp.lt.s32.totalorder %s362, 15
      %s364 = scalar_select %p363, %s362, 15
      %s365 = smul.addr %s364, 8
      %s366 = scalar_lea.vmem %s4, %s365
      %s367 = smul.u32 16, %s24
      %p368 = scmp.lt.s32.totalorder %s25, 0
      %s369 = scalar_select %p368, %s25, 0
      %s370 = scalar_lea.vmem %s5, %s369
      %s371 = smul.u32 16, %s24
      %p372 = scmp.lt.s32.totalorder %s23, 3
      %s373 = scalar_select %p372, %s23, 3
      %p374 = scmp.lt.s32.totalorder %s371, 15
      %s375 = scalar_select %p374, %s371, 15
      %s376 = smul.addr %s373, 16
      %s377 = sadd.s32 %s375, %s376
      %s378 = smul.addr %s377, 4
      %s379 = scalar_lea.vmem %s6, %s378
      %s380 = smul.u32 16, %s24
      %p382 = scmp.eq.s32.totalorder %s25, 0
      // Predicated region
      $region41: #{vision_attention_forward.4} parent=39 // pred_check
        %p383 = pneg %p382
      $region42: #{vision_attention_forward.4} parent=39 // pred_check_branch
        %385 = sbr.rel (%p383) target = $region44
      $region43: #{vision_attention_forward.4} parent=39 // pred_region
        %vm386 = vcmask 7168
        %387 = vst.msk [vmem:[#allocation2] sm:$0xff] %vm386, -1e+30
        %388 = vst.msk [vmem:[#allocation2 + $0x8] sm:$0xff] %vm386, -1e+30
        %389 = vst.msk [vmem:[#allocation2 + $0x10] sm:$0xff] %vm386, -1e+30
        %390 = vst.msk [vmem:[#allocation2 + $0x18] sm:$0xff] %vm386, -1e+30
        %391 = vst.msk [vmem:[#allocation2 + $0x20] sm:$0xff] %vm386, -1e+30
        %392 = vst.msk [vmem:[#allocation2 + $0x28] sm:$0xff] %vm386, -1e+30
        %393 = vst.msk [vmem:[#allocation2 + $0x30] sm:$0xff] %vm386, -1e+30
        %394 = vst.msk [vmem:[#allocation2 + $0x38] sm:$0xff] %vm386, -1e+30
        %395 = vst.msk [vmem:[#allocation2 + $0x40] sm:$0xff] %vm386, -1e+30
        %396 = vst.msk [vmem:[#allocation2 + $0x48] sm:$0xff] %vm386, -1e+30
        %397 = vst.msk [vmem:[#allocation2 + $0x50] sm:$0xff] %vm386, -1e+30
        %398 = vst.msk [vmem:[#allocation2 + $0x58] sm:$0xff] %vm386, -1e+30
        %399 = vst.msk [vmem:[#allocation2 + $0x60] sm:$0xff] %vm386, -1e+30
        %400 = vst.msk [vmem:[#allocation2 + $0x68] sm:$0xff] %vm386, -1e+30
        %401 = vst.msk [vmem:[#allocation2 + $0x70] sm:$0xff] %vm386, -1e+30
        %402 = vst.msk [vmem:[#allocation2 + $0x78] sm:$0xff] %vm386, -1e+30
        %403 = vst.msk [vmem:[#allocation3] sm:$0xff] %vm386, 0.0
        %404 = vst.msk [vmem:[#allocation3 + $0x8] sm:$0xff] %vm386, 0.0
        %405 = vst.msk [vmem:[#allocation3 + $0x10] sm:$0xff] %vm386, 0.0
        %406 = vst.msk [vmem:[#allocation3 + $0x18] sm:$0xff] %vm386, 0.0
        %407 = vst.msk [vmem:[#allocation3 + $0x20] sm:$0xff] %vm386, 0.0
        %408 = vst.msk [vmem:[#allocation3 + $0x28] sm:$0xff] %vm386, 0.0
        %409 = vst.msk [vmem:[#allocation3 + $0x30] sm:$0xff] %vm386, 0.0
        %410 = vst.msk [vmem:[#allocation3 + $0x38] sm:$0xff] %vm386, 0.0
        %411 = vst.msk [vmem:[#allocation3 + $0x40] sm:$0xff] %vm386, 0.0
        %412 = vst.msk [vmem:[#allocation3 + $0x48] sm:$0xff] %vm386, 0.0
        %413 = vst.msk [vmem:[#allocation3 + $0x50] sm:$0xff] %vm386, 0.0
        %414 = vst.msk [vmem:[#allocation3 + $0x58] sm:$0xff] %vm386, 0.0
        %415 = vst.msk [vmem:[#allocation3 + $0x60] sm:$0xff] %vm386, 0.0
        %416 = vst.msk [vmem:[#allocation3 + $0x68] sm:$0xff] %vm386, 0.0
        %417 = vst.msk [vmem:[#allocation3 + $0x70] sm:$0xff] %vm386, 0.0
        %418 = vst.msk [vmem:[#allocation3 + $0x78] sm:$0xff] %vm386, 0.0
        %vm419 = vcmask 261120
        %420 = vst.msk [vmem:[#allocation4] sm:$0xff] %vm419, 0.0
        %421 = vst.msk [vmem:[#allocation4 + $0x8] sm:$0xff] %vm419, 0.0
        %422 = vst.msk [vmem:[#allocation4 + $0x10] sm:$0xff] %vm419, 0.0
        %423 = vst.msk [vmem:[#allocation4 + $0x18] sm:$0xff] %vm419, 0.0
        %424 = vst.msk [vmem:[#allocation4 + $0x20] sm:$0xff] %vm419, 0.0
        %425 = vst.msk [vmem:[#allocation4 + $0x28] sm:$0xff] %vm419, 0.0
        %426 = vst.msk [vmem:[#allocation4 + $0x30] sm:$0xff] %vm419, 0.0
        %427 = vst.msk [vmem:[#allocation4 + $0x38] sm:$0xff] %vm419, 0.0
        %428 = vst.msk [vmem:[#allocation4 + $0x40] sm:$0xff] %vm419, 0.0
        %429 = vst.msk [vmem:[#allocation4 + $0x48] sm:$0xff] %vm419, 0.0
        %430 = vst.msk [vmem:[#allocation4 + $0x50] sm:$0xff] %vm419, 0.0
        %431 = vst.msk [vmem:[#allocation4 + $0x58] sm:$0xff] %vm419, 0.0
        %432 = vst.msk [vmem:[#allocation4 + $0x60] sm:$0xff] %vm419, 0.0
        %433 = vst.msk [vmem:[#allocation4 + $0x68] sm:$0xff] %vm419, 0.0
        %434 = vst.msk [vmem:[#allocation4 + $0x70] sm:$0xff] %vm419, 0.0
        %435 = vst.msk [vmem:[#allocation4 + $0x78] sm:$0xff] %vm419, 0.0
      $region44: #{vision_attention_forward.4} parent=39 // pred_fallthru
        _
      %s436 = sshra.s32 %s25, 7
      %s437 = sand.u32 %s25, 127
      %s438 = sadd.s32 %s436, %s24
      %s439 = smul.u32 %s438, 128
      %s440 = sshra.s32 %s25, 7
      %s441 = sand.u32 %s25, 127
      %s442 = sadd.s32 %s439, %s441
      %s443 = sld [smem:[#allocation6 + %s442]]
      %p444 = scmp.ne.s32.totalorder %s443, 0
      // Predicated region
      $region45: #{vision_attention_forward.4} parent=39 // pred_check
        %p445 = pneg %p444
      $region46: #{vision_attention_forward.4} parent=39 // pred_check_branch
        %447 = sbr.rel (%p445) target = $region48
      $region47: #{vision_attention_forward.4} parent=39 // pred_region
        %v448 = vld [vmem:[%s340] sm:$0xf]
        %v449 = vld [vmem:[%s340 + $0x4] sm:$0xf]
        %v450 = vld [vmem:[%s340 + $0x8] sm:$0xf]
        %v451 = vld [vmem:[%s340 + $0xc] sm:$0xf]
        %v452 = vld [vmem:[%s340 + $0x10] sm:$0xf]
        %v453 = vld [vmem:[%s340 + $0x14] sm:$0xf]
        %v454 = vld [vmem:[%s340 + $0x18] sm:$0xf]
        %v455 = vld [vmem:[%s340 + $0x1c] sm:$0xf]
        %v456 = vld [vmem:[%s340 + $0x20] sm:$0xf]
        %v457 = vld [vmem:[%s340 + $0x24] sm:$0xf]
        %v458 = vld [vmem:[%s340 + $0x28] sm:$0xf]
        %v459 = vld [vmem:[%s340 + $0x2c] sm:$0xf]
        %v460 = vld [vmem:[%s340 + $0x30] sm:$0xf]
        %v461 = vld [vmem:[%s340 + $0x34] sm:$0xf]
        %v462 = vld [vmem:[%s340 + $0x38] sm:$0xf]
        %v463 = vld [vmem:[%s340 + $0x3c] sm:$0xf]
        %v464 = vld [vmem:[%s350] sm:$0xf]
        %v465 = vld [vmem:[%s350 + $0x4] sm:$0xf]
        %v466 = vld [vmem:[%s350 + $0x8] sm:$0xf]
        %v467 = vld [vmem:[%s350 + $0xc] sm:$0xf]
        %v468 = vld [vmem:[%s350 + $0x10] sm:$0xf]
        %v469 = vld [vmem:[%s350 + $0x14] sm:$0xf]
        %v470 = vld [vmem:[%s350 + $0x18] sm:$0xf]
        %v471 = vld [vmem:[%s350 + $0x1c] sm:$0xf]
        %v472 = vld [vmem:[%s350 + $0x20] sm:$0xf]
        %v473 = vld [vmem:[%s350 + $0x24] sm:$0xf]
        %v474 = vld [vmem:[%s350 + $0x28] sm:$0xf]
        %v475 = vld [vmem:[%s350 + $0x2c] sm:$0xf]
        %v476 = vld [vmem:[%s350 + $0x30] sm:$0xf]
        %v477 = vld [vmem:[%s350 + $0x34] sm:$0xf]
        %v478 = vld [vmem:[%s350 + $0x38] sm:$0xf]
        %v479 = vld [vmem:[%s350 + $0x3c] sm:$0xf]
        %v496 = vunpack.c.l.b16 %v448
        %v497 = vunpack.c.l.b16 %v449
        %v498 = vunpack.c.l.b16 %v450
        %v499 = vunpack.c.l.b16 %v451
        %v500 = vunpack.c.l.b16 %v452
        %v501 = vunpack.c.l.b16 %v453
        %v502 = vunpack.c.l.b16 %v454
        %v503 = vunpack.c.l.b16 %v455
        %v504 = vunpack.c.l.b16 %v456
        %v505 = vunpack.c.l.b16 %v457
        %v506 = vunpack.c.l.b16 %v458
        %v507 = vunpack.c.l.b16 %v459
        %v508 = vunpack.c.l.b16 %v460
        %v509 = vunpack.c.l.b16 %v461
        %v510 = vunpack.c.l.b16 %v462
        %v511 = vunpack.c.l.b16 %v463
        %v512 = vpack.c.b16 %v497, %v496
        %v513 = vpack.c.b16 %v499, %v498
        %v514 = vpack.c.b16 %v501, %v500
        %v515 = vpack.c.b16 %v503, %v502
        %v516 = vpack.c.b16 %v505, %v504
        %v517 = vpack.c.b16 %v507, %v506
        %v518 = vpack.c.b16 %v509, %v508
        %v519 = vpack.c.b16 %v511, %v510
        %v536 = vunpack.c.l.b16 %v464
        %v537 = vunpack.c.l.b16 %v465
        %v538 = vunpack.c.l.b16 %v466
        %v539 = vunpack.c.l.b16 %v467
        %v540 = vunpack.c.l.b16 %v468
        %v541 = vunpack.c.l.b16 %v469
        %v542 = vunpack.c.l.b16 %v470
        %v543 = vunpack.c.l.b16 %v471
        %v544 = vunpack.c.l.b16 %v472
        %v545 = vunpack.c.l.b16 %v473
        %v546 = vunpack.c.l.b16 %v474
        %v547 = vunpack.c.l.b16 %v475
        %v548 = vunpack.c.l.b16 %v476
        %v549 = vunpack.c.l.b16 %v477
        %v550 = vunpack.c.l.b16 %v478
        %v551 = vunpack.c.l.b16 %v479
        %v552 = vpack.c.b16 %v537, %v536
        %v553 = vpack.c.b16 %v539, %v538
        %v554 = vpack.c.b16 %v541, %v540
        %v555 = vpack.c.b16 %v543, %v542
        %v556 = vpack.c.b16 %v545, %v544
        %v557 = vpack.c.b16 %v547, %v546
        %v558 = vpack.c.b16 %v549, %v548
        %v559 = vpack.c.b16 %v551, %v550
        %vm560 = vcmask 261120
        %v562 = vsel %vm560, %v512, 0
        %v565 = vsel %vm560, %v513, 0
        %v568 = vsel %vm560, %v514, 0
        %v571 = vsel %vm560, %v515, 0
        %v574 = vsel %vm560, %v516, 0
        %v577 = vsel %vm560, %v517, 0
        %v580 = vsel %vm560, %v518, 0
        %v583 = vsel %vm560, %v519, 0
        %v586 = vsel %vm560, %v552, 0
        %v589 = vsel %vm560, %v553, 0
        %v592 = vsel %vm560, %v554, 0
        %v595 = vsel %vm560, %v555, 0
        %v598 = vsel %vm560, %v556, 0
        %v601 = vsel %vm560, %v557, 0
        %v604 = vsel %vm560, %v558, 0
        %v607 = vsel %vm560, %v559, 0
        %609 = vmatprep.subr.bf16.mxu0 0
        %610 = vmatpush1.bf16.xpose.msra.mxu0 %v586
        %611 = vmatprep.subr.bf16.mxu0 0
        %612 = vmatpush1.bf16.xpose.msra.mxu0 %v589
        %613 = vmatprep.subr.bf16.mxu0 0
        %614 = vmatpush1.bf16.xpose.msra.mxu0 %v592
        %615 = vmatprep.subr.bf16.mxu0 0
        %616 = vmatpush1.bf16.xpose.msra.mxu0 %v595
        %617 = vmatprep.subr.bf16.mxu0 0
        %618 = vmatpush1.bf16.xpose.msra.mxu0 %v598
        %619 = vmatprep.subr.bf16.mxu0 0
        %620 = vmatpush1.bf16.xpose.msra.mxu0 %v601
        %621 = vmatprep.subr.bf16.mxu0 0
        %622 = vmatpush1.bf16.xpose.msra.mxu0 %v604
        %623 = vmatprep.subr.bf16.mxu0 0
        %624 = vmatpush1.bf16.xpose.msra.mxu0 %v607
        %625 = vmatprep.subr.bf16.mxu0 0
        %626 = vmatpush1.bf16.xpose.msra.mxu0 0
        %627 = vmatprep.subr.bf16.mxu0 0
        %628 = vmatpush1.bf16.xpose.msra.mxu0 0
        %629 = vmatprep.subr.bf16.mxu0 0
        %630 = vmatpush1.bf16.xpose.msra.mxu0 0
        %631 = vmatprep.subr.bf16.mxu0 0
        %632 = vmatpush1.bf16.xpose.msra.mxu0 0
        %633 = vmatprep.subr.bf16.mxu0 0
        %634 = vmatpush1.bf16.xpose.msra.mxu0 0
        %635 = vmatprep.subr.bf16.mxu0 0
        %636 = vmatpush1.bf16.xpose.msra.mxu0 0
        %637 = vmatprep.subr.bf16.mxu0 0
        %638 = vmatpush1.bf16.xpose.msra.mxu0 0
        %639 = vmatprep.subr.bf16.mxu0 0
        %640 = vmatpush1.bf16.xpose.msra.mxu0 0
        %641 = vmatprep.mubr.bf16.mxu0 0
        %642 = vmatmul.mubr.bf16.gmra.mrb[0].mxu0 %v562
        %v643 = vpop.f32.mrb[0].mxu0
        %v644 = vadd.f32 0.0, %v643
        %v645 = vpop.f32.mrb[0].mxu0
        %v646 = vpop.f32.mrb[0].mxu0
        %v647 = vadd.f32 0.0, %v646
        %v648 = vpop.f32.mrb[0].mxu0
        %649 = vmatprep.mubr.bf16.mxu0 0
        %650 = vmatmul.mubr.bf16.gmra.mrb[0].mxu0 %v565
        %v651 = vpop.f32.mrb[0].mxu0
        %v652 = vadd.f32 0.0, %v651
        %v653 = vpop.f32.mrb[0].mxu0
        %v654 = vpop.f32.mrb[0].mxu0
        %v655 = vadd.f32 0.0, %v654
        %v656 = vpop.f32.mrb[0].mxu0
        %657 = vmatprep.mubr.bf16.mxu0 0
        %658 = vmatmul.mubr.bf16.gmra.mrb[0].mxu0 %v568
        %v659 = vpop.f32.mrb[0].mxu0
        %v660 = vadd.f32 0.0, %v659
        %v661 = vpop.f32.mrb[0].mxu0
        %v662 = vpop.f32.mrb[0].mxu0
        %v663 = vadd.f32 0.0, %v662
        %v664 = vpop.f32.mrb[0].mxu0
        %665 = vmatprep.mubr.bf16.mxu0 0
        %666 = vmatmul.mubr.bf16.gmra.mrb[0].mxu0 %v571
        %v667 = vpop.f32.mrb[0].mxu0
        %v668 = vadd.f32 0.0, %v667
        %v669 = vpop.f32.mrb[0].mxu0
        %v670 = vpop.f32.mrb[0].mxu0
        %v671 = vadd.f32 0.0, %v670
        %v672 = vpop.f32.mrb[0].mxu0
        %673 = vmatprep.mubr.bf16.mxu0 0
        %674 = vmatmul.mubr.bf16.gmra.mrb[0].mxu0 %v574
        %v675 = vpop.f32.mrb[0].mxu0
        %v676 = vadd.f32 0.0, %v675
        %v677 = vpop.f32.mrb[0].mxu0
        %v678 = vpop.f32.mrb[0].mxu0
        %v679 = vadd.f32 0.0, %v678
        %v680 = vpop.f32.mrb[0].mxu0
        %681 = vmatprep.mubr.bf16.mxu0 0
        %682 = vmatmul.mubr.bf16.gmra.mrb[0].mxu0 %v577
        %v683 = vpop.f32.mrb[0].mxu0
        %v684 = vadd.f32 0.0, %v683
        %v685 = vpop.f32.mrb[0].mxu0
        %v686 = vpop.f32.mrb[0].mxu0
        %v687 = vadd.f32 0.0, %v686
        %v688 = vpop.f32.mrb[0].mxu0
        %689 = vmatprep.mubr.bf16.mxu0 0
        %690 = vmatmul.mubr.bf16.gmra.mrb[0].mxu0 %v580
        %v691 = vpop.f32.mrb[0].mxu0
        %v692 = vadd.f32 0.0, %v691
        %v693 = vpop.f32.mrb[0].mxu0
        %v694 = vpop.f32.mrb[0].mxu0
        %v695 = vadd.f32 0.0, %v694
        %v696 = vpop.f32.mrb[0].mxu0
        %697 = vmatprep.mubr.bf16.mxu0 0
        %698 = vmatmul.mubr.bf16.gmra.mrb[0].mxu0 %v583
        %v699 = vpop.f32.mrb[0].mxu0
        %v700 = vadd.f32 0.0, %v699
        %v701 = vpop.f32.mrb[0].mxu0
        %v702 = vpop.f32.mrb[0].mxu0
        %v703 = vadd.f32 0.0, %v702
        %v704 = vpop.f32.mrb[0].mxu0
        %705 = vdwg.mxu0
        %v706 = vld [vmem:[%s366] sm:$0xff]
        %v707 = vld [vmem:[%s366 + $0x8] sm:$0xff]
        %v708 = vld [vmem:[%s366 + $0x10] sm:$0xff]
        %v709 = vld [vmem:[%s366 + $0x18] sm:$0xff]
        %v710 = vld [vmem:[%s366 + $0x20] sm:$0xff]
        %v711 = vld [vmem:[%s366 + $0x28] sm:$0xff]
        %v712 = vld [vmem:[%s366 + $0x30] sm:$0xff]
        %v713 = vld [vmem:[%s366 + $0x38] sm:$0xff]
        %v714 = vld [vmem:[%s366 + $0x40] sm:$0xff]
        %v715 = vld [vmem:[%s366 + $0x48] sm:$0xff]
        %v716 = vld [vmem:[%s366 + $0x50] sm:$0xff]
        %v717 = vld [vmem:[%s366 + $0x58] sm:$0xff]
        %v718 = vld [vmem:[%s366 + $0x60] sm:$0xff]
        %v719 = vld [vmem:[%s366 + $0x68] sm:$0xff]
        %v720 = vld [vmem:[%s366 + $0x70] sm:$0xff]
        %v721 = vld [vmem:[%s366 + $0x78] sm:$0xff]
        %v722 = vld [vmem:[%s370] sm:$0x1]
        %723 = vset.pattern.permute.xlu0 0
        %724 = vperm.xlu0 %723, %v706
        %v725 = vpop.permute.xlu0 %724
        %726 = vset.pattern.permute.xlu0 0
        %727 = vperm.xlu0 %726, %v707
        %v728 = vpop.permute.xlu0 %727
        %729 = vset.pattern.permute.xlu0 0
        %730 = vperm.xlu0 %729, %v708
        %v731 = vpop.permute.xlu0 %730
        %732 = vset.pattern.permute.xlu0 0
        %733 = vperm.xlu0 %732, %v709
        %v734 = vpop.permute.xlu0 %733
        %735 = vset.pattern.permute.xlu0 0
        %736 = vperm.xlu0 %735, %v710
        %v737 = vpop.permute.xlu0 %736
        %738 = vset.pattern.permute.xlu0 0
        %739 = vperm.xlu0 %738, %v711
        %v740 = vpop.permute.xlu0 %739
        %741 = vset.pattern.permute.xlu0 0
        %742 = vperm.xlu0 %741, %v712
        %v743 = vpop.permute.xlu0 %742
        %744 = vset.pattern.permute.xlu0 0
        %745 = vperm.xlu0 %744, %v713
        %v746 = vpop.permute.xlu0 %745
        %747 = vset.pattern.permute.xlu0 0
        %748 = vperm.xlu0 %747, %v714
        %v749 = vpop.permute.xlu0 %748
        %750 = vset.pattern.permute.xlu0 0
        %751 = vperm.xlu0 %750, %v715
        %v752 = vpop.permute.xlu0 %751
        %753 = vset.pattern.permute.xlu0 0
        %754 = vperm.xlu0 %753, %v716
        %v755 = vpop.permute.xlu0 %754
        %756 = vset.pattern.permute.xlu0 0
        %757 = vperm.xlu0 %756, %v717
        %v758 = vpop.permute.xlu0 %757
        %759 = vset.pattern.permute.xlu0 0
        %760 = vperm.xlu0 %759, %v718
        %v761 = vpop.permute.xlu0 %760
        %762 = vset.pattern.permute.xlu0 0
        %763 = vperm.xlu0 %762, %v719
        %v764 = vpop.permute.xlu0 %763
        %765 = vset.pattern.permute.xlu0 0
        %766 = vperm.xlu0 %765, %v720
        %v767 = vpop.permute.xlu0 %766
        %768 = vset.pattern.permute.xlu0 0
        %769 = vperm.xlu0 %768, %v721
        %v770 = vpop.permute.xlu0 %769
        %v771 = vlaneseq
        %v772 = vshrl.u32 %v771, 7
        %v773 = vsub.s32 0, %v772
        %v774 = vrot.slane %v722, %v773
        %vm775 = vcmp.eq.s32.totalorder %v725, %v774
        %vm776 = vcmp.eq.s32.totalorder %v728, %v774
        %vm777 = vcmp.eq.s32.totalorder %v731, %v774
        %vm778 = vcmp.eq.s32.totalorder %v734, %v774
        %vm779 = vcmp.eq.s32.totalorder %v737, %v774
        %vm780 = vcmp.eq.s32.totalorder %v740, %v774
        %vm781 = vcmp.eq.s32.totalorder %v743, %v774
        %vm782 = vcmp.eq.s32.totalorder %v746, %v774
        %vm783 = vcmp.eq.s32.totalorder %v749, %v774
        %vm784 = vcmp.eq.s32.totalorder %v752, %v774
        %vm785 = vcmp.eq.s32.totalorder %v755, %v774
        %vm786 = vcmp.eq.s32.totalorder %v758, %v774
        %vm787 = vcmp.eq.s32.totalorder %v761, %v774
        %vm788 = vcmp.eq.s32.totalorder %v764, %v774
        %vm789 = vcmp.eq.s32.totalorder %v767, %v774
        %vm790 = vcmp.eq.s32.totalorder %v770, %v774
        %v791 = vsel %vm775, %v644, -1e+30
        %v792 = vsel %vm776, %v647, -1e+30
        %v793 = vsel %vm777, %v652, -1e+30
        %v794 = vsel %vm778, %v655, -1e+30
        %v795 = vsel %vm779, %v660, -1e+30
        %v796 = vsel %vm780, %v663, -1e+30
        %v797 = vsel %vm781, %v668, -1e+30
        %v798 = vsel %vm782, %v671, -1e+30
        %v799 = vsel %vm783, %v676, -1e+30
        %v800 = vsel %vm784, %v679, -1e+30
        %v801 = vsel %vm785, %v684, -1e+30
        %v802 = vsel %vm786, %v687, -1e+30
        %v803 = vsel %vm787, %v692, -1e+30
        %v804 = vsel %vm788, %v695, -1e+30
        %v805 = vsel %vm789, %v700, -1e+30
        %v806 = vsel %vm790, %v703, -1e+30
        %v807 = vld [vmem:[#allocation2] sm:$0xff]
        %v808 = vld [vmem:[#allocation2 + $0x8] sm:$0xff]
        %v809 = vld [vmem:[#allocation2 + $0x10] sm:$0xff]
        %v810 = vld [vmem:[#allocation2 + $0x18] sm:$0xff]
        %v811 = vld [vmem:[#allocation2 + $0x20] sm:$0xff]
        %v812 = vld [vmem:[#allocation2 + $0x28] sm:$0xff]
        %v813 = vld [vmem:[#allocation2 + $0x30] sm:$0xff]
        %v814 = vld [vmem:[#allocation2 + $0x38] sm:$0xff]
        %v815 = vld [vmem:[#allocation2 + $0x40] sm:$0xff]
        %v816 = vld [vmem:[#allocation2 + $0x48] sm:$0xff]
        %v817 = vld [vmem:[#allocation2 + $0x50] sm:$0xff]
        %v818 = vld [vmem:[#allocation2 + $0x58] sm:$0xff]
        %v819 = vld [vmem:[#allocation2 + $0x60] sm:$0xff]
        %v820 = vld [vmem:[#allocation2 + $0x68] sm:$0xff]
        %v821 = vld [vmem:[#allocation2 + $0x70] sm:$0xff]
        %v822 = vld [vmem:[#allocation2 + $0x78] sm:$0xff]
        %823 = vmax.xlane.f32.xlu0 %v791
        %v824 = vpop.xlane.xlu0 %823
        %825 = vmax.xlane.f32.xlu0 %v792
        %v826 = vpop.xlane.xlu0 %825
        %827 = vmax.xlane.f32.xlu0 %v793
        %v828 = vpop.xlane.xlu0 %827
        %829 = vmax.xlane.f32.xlu0 %v794
        %v830 = vpop.xlane.xlu0 %829
        %831 = vmax.xlane.f32.xlu0 %v795
        %v832 = vpop.xlane.xlu0 %831
        %833 = vmax.xlane.f32.xlu0 %v796
        %v834 = vpop.xlane.xlu0 %833
        %835 = vmax.xlane.f32.xlu0 %v797
        %v836 = vpop.xlane.xlu0 %835
        %837 = vmax.xlane.f32.xlu0 %v798
        %v838 = vpop.xlane.xlu0 %837
        %839 = vmax.xlane.f32.xlu0 %v799
        %v840 = vpop.xlane.xlu0 %839
        %841 = vmax.xlane.f32.xlu0 %v800
        %v842 = vpop.xlane.xlu0 %841
        %843 = vmax.xlane.f32.xlu0 %v801
        %v844 = vpop.xlane.xlu0 %843
        %845 = vmax.xlane.f32.xlu0 %v802
        %v846 = vpop.xlane.xlu0 %845
        %847 = vmax.xlane.f32.xlu0 %v803
        %v848 = vpop.xlane.xlu0 %847
        %849 = vmax.xlane.f32.xlu0 %v804
        %v850 = vpop.xlane.xlu0 %849
        %851 = vmax.xlane.f32.xlu0 %v805
        %v852 = vpop.xlane.xlu0 %851
        %853 = vmax.xlane.f32.xlu0 %v806
        %v854 = vpop.xlane.xlu0 %853
        %v855 = vmax.f32 %v807, %v824
        %v856 = vmax.f32 %v808, %v826
        %v857 = vmax.f32 %v809, %v828
        %v858 = vmax.f32 %v810, %v830
        %v859 = vmax.f32 %v811, %v832
        %v860 = vmax.f32 %v812, %v834
        %v861 = vmax.f32 %v813, %v836
        %v862 = vmax.f32 %v814, %v838
        %v863 = vmax.f32 %v815, %v840
        %v864 = vmax.f32 %v816, %v842
        %v865 = vmax.f32 %v817, %v844
        %v866 = vmax.f32 %v818, %v846
        %v867 = vmax.f32 %v819, %v848
        %v868 = vmax.f32 %v820, %v850
        %v869 = vmax.f32 %v821, %v852
        %v870 = vmax.f32 %v822, %v854
        %v871 = vsub.f32 %v807, %v855
        %v872 = vsub.f32 %v808, %v856
        %v873 = vsub.f32 %v809, %v857
        %v874 = vsub.f32 %v810, %v858
        %v875 = vsub.f32 %v811, %v859
        %v876 = vsub.f32 %v812, %v860
        %v877 = vsub.f32 %v813, %v861
        %v878 = vsub.f32 %v814, %v862
        %v879 = vsub.f32 %v815, %v863
        %v880 = vsub.f32 %v816, %v864
        %v881 = vsub.f32 %v817, %v865
        %v882 = vsub.f32 %v818, %v866
        %v883 = vsub.f32 %v819, %v867
        %v884 = vsub.f32 %v820, %v868
        %v885 = vsub.f32 %v821, %v869
        %v886 = vsub.f32 %v822, %v870
        %v887 = vmul.f32 %v871, 1.442695
        %v888 = vpow.pop %v887
        %v889 = vmul.f32 %v872, 1.442695
        %v890 = vpow.pop %v889
        %v891 = vmul.f32 %v873, 1.442695
        %v892 = vpow.pop %v891
        %v893 = vmul.f32 %v874, 1.442695
        %v894 = vpow.pop %v893
        %v895 = vmul.f32 %v875, 1.442695
        %v896 = vpow.pop %v895
        %v897 = vmul.f32 %v876, 1.442695
        %v898 = vpow.pop %v897
        %v899 = vmul.f32 %v877, 1.442695
        %v900 = vpow.pop %v899
        %v901 = vmul.f32 %v878, 1.442695
        %v902 = vpow.pop %v901
        %v903 = vmul.f32 %v879, 1.442695
        %v904 = vpow.pop %v903
        %v905 = vmul.f32 %v880, 1.442695
        %v906 = vpow.pop %v905
        %v907 = vmul.f32 %v881, 1.442695
        %v908 = vpow.pop %v907
        %v909 = vmul.f32 %v882, 1.442695
        %v910 = vpow.pop %v909
        %v911 = vmul.f32 %v883, 1.442695
        %v912 = vpow.pop %v911
        %v913 = vmul.f32 %v884, 1.442695
        %v914 = vpow.pop %v913
        %v915 = vmul.f32 %v885, 1.442695
        %v916 = vpow.pop %v915
        %v917 = vmul.f32 %v886, 1.442695
        %v918 = vpow.pop %v917
        %920 = vset.pattern.permute.xlu0 0
        %921 = vperm.xlu0 %920, %v855
        %v922 = vpop.permute.xlu0 %921
        %925 = vset.pattern.permute.xlu0 0
        %926 = vperm.xlu0 %925, %v856
        %v927 = vpop.permute.xlu0 %926
        %930 = vset.pattern.permute.xlu0 0
        %931 = vperm.xlu0 %930, %v857
        %v932 = vpop.permute.xlu0 %931
        %935 = vset.pattern.permute.xlu0 0
        %936 = vperm.xlu0 %935, %v858
        %v937 = vpop.permute.xlu0 %936
        %940 = vset.pattern.permute.xlu0 0
        %941 = vperm.xlu0 %940, %v859
        %v942 = vpop.permute.xlu0 %941
        %945 = vset.pattern.permute.xlu0 0
        %946 = vperm.xlu0 %945, %v860
        %v947 = vpop.permute.xlu0 %946
        %950 = vset.pattern.permute.xlu0 0
        %951 = vperm.xlu0 %950, %v861
        %v952 = vpop.permute.xlu0 %951
        %955 = vset.pattern.permute.xlu0 0
        %956 = vperm.xlu0 %955, %v862
        %v957 = vpop.permute.xlu0 %956
        %960 = vset.pattern.permute.xlu0 0
        %961 = vperm.xlu0 %960, %v863
        %v962 = vpop.permute.xlu0 %961
        %965 = vset.pattern.permute.xlu0 0
        %966 = vperm.xlu0 %965, %v864
        %v967 = vpop.permute.xlu0 %966
        %970 = vset.pattern.permute.xlu0 0
        %971 = vperm.xlu0 %970, %v865
        %v972 = vpop.permute.xlu0 %971
        %975 = vset.pattern.permute.xlu0 0
        %976 = vperm.xlu0 %975, %v866
        %v977 = vpop.permute.xlu0 %976
        %980 = vset.pattern.permute.xlu0 0
        %981 = vperm.xlu0 %980, %v867
        %v982 = vpop.permute.xlu0 %981
        %985 = vset.pattern.permute.xlu0 0
        %986 = vperm.xlu0 %985, %v868
        %v987 = vpop.permute.xlu0 %986
        %990 = vset.pattern.permute.xlu0 0
        %991 = vperm.xlu0 %990, %v869
        %v992 = vpop.permute.xlu0 %991
        %995 = vset.pattern.permute.xlu0 0
        %996 = vperm.xlu0 %995, %v870
        %v997 = vpop.permute.xlu0 %996
        %v999 = vsub.f32 %v791, %v922
        %v1000 = vsub.f32 %v792, %v927
        %v1001 = vsub.f32 %v793, %v932
        %v1002 = vsub.f32 %v794, %v937
        %v1003 = vsub.f32 %v795, %v942
        %v1004 = vsub.f32 %v796, %v947
        %v1005 = vsub.f32 %v797, %v952
        %v1006 = vsub.f32 %v798, %v957
        %v1007 = vsub.f32 %v799, %v962
        %v1008 = vsub.f32 %v800, %v967
        %v1009 = vsub.f32 %v801, %v972
        %v1010 = vsub.f32 %v802, %v977
        %v1011 = vsub.f32 %v803, %v982
        %v1012 = vsub.f32 %v804, %v987
        %v1013 = vsub.f32 %v805, %v992
        %v1014 = vsub.f32 %v806, %v997
        %v1015 = vmul.f32 %v999, 1.442695
        %v1016 = vpow.pop %v1015
        %v1017 = vmul.f32 %v1000, 1.442695
        %v1018 = vpow.pop %v1017
        %v1019 = vmul.f32 %v1001, 1.442695
        %v1020 = vpow.pop %v1019
        %v1021 = vmul.f32 %v1002, 1.442695
        %v1022 = vpow.pop %v1021
        %v1023 = vmul.f32 %v1003, 1.442695
        %v1024 = vpow.pop %v1023
        %v1025 = vmul.f32 %v1004, 1.442695
        %v1026 = vpow.pop %v1025
        %v1027 = vmul.f32 %v1005, 1.442695
        %v1028 = vpow.pop %v1027
        %v1029 = vmul.f32 %v1006, 1.442695
        %v1030 = vpow.pop %v1029
        %v1031 = vmul.f32 %v1007, 1.442695
        %v1032 = vpow.pop %v1031
        %v1033 = vmul.f32 %v1008, 1.442695
        %v1034 = vpow.pop %v1033
        %v1035 = vmul.f32 %v1009, 1.442695
        %v1036 = vpow.pop %v1035
        %v1037 = vmul.f32 %v1010, 1.442695
        %v1038 = vpow.pop %v1037
        %v1039 = vmul.f32 %v1011, 1.442695
        %v1040 = vpow.pop %v1039
        %v1041 = vmul.f32 %v1012, 1.442695
        %v1042 = vpow.pop %v1041
        %v1043 = vmul.f32 %v1013, 1.442695
        %v1044 = vpow.pop %v1043
        %v1045 = vmul.f32 %v1014, 1.442695
        %v1046 = vpow.pop %v1045
        %v1047 = vsel %vm775, %v1016, 0.0
        %v1048 = vsel %vm776, %v1018, 0.0
        %v1049 = vsel %vm777, %v1020, 0.0
        %v1050 = vsel %vm778, %v1022, 0.0
        %v1051 = vsel %vm779, %v1024, 0.0
        %v1052 = vsel %vm780, %v1026, 0.0
        %v1053 = vsel %vm781, %v1028, 0.0
        %v1054 = vsel %vm782, %v1030, 0.0
        %v1055 = vsel %vm783, %v1032, 0.0
        %v1056 = vsel %vm784, %v1034, 0.0
        %v1057 = vsel %vm785, %v1036, 0.0
        %v1058 = vsel %vm786, %v1038, 0.0
        %v1059 = vsel %vm787, %v1040, 0.0
        %v1060 = vsel %vm788, %v1042, 0.0
        %v1061 = vsel %vm789, %v1044, 0.0
        %v1062 = vsel %vm790, %v1046, 0.0
        %v1063 = vld [vmem:[#allocation3] sm:$0xff]
        %v1064 = vld [vmem:[#allocation3 + $0x8] sm:$0xff]
        %v1065 = vld [vmem:[#allocation3 + $0x10] sm:$0xff]
        %v1066 = vld [vmem:[#allocation3 + $0x18] sm:$0xff]
        %v1067 = vld [vmem:[#allocation3 + $0x20] sm:$0xff]
        %v1068 = vld [vmem:[#allocation3 + $0x28] sm:$0xff]
        %v1069 = vld [vmem:[#allocation3 + $0x30] sm:$0xff]
        %v1070 = vld [vmem:[#allocation3 + $0x38] sm:$0xff]
        %v1071 = vld [vmem:[#allocation3 + $0x40] sm:$0xff]
        %v1072 = vld [vmem:[#allocation3 + $0x48] sm:$0xff]
        %v1073 = vld [vmem:[#allocation3 + $0x50] sm:$0xff]
        %v1074 = vld [vmem:[#allocation3 + $0x58] sm:$0xff]
        %v1075 = vld [vmem:[#allocation3 + $0x60] sm:$0xff]
        %v1076 = vld [vmem:[#allocation3 + $0x68] sm:$0xff]
        %v1077 = vld [vmem:[#allocation3 + $0x70] sm:$0xff]
        %v1078 = vld [vmem:[#allocation3 + $0x78] sm:$0xff]
        %v1079 = vmul.f32 %v888, %v1063
        %v1080 = vmul.f32 %v890, %v1064
        %v1081 = vmul.f32 %v892, %v1065
        %v1082 = vmul.f32 %v894, %v1066
        %v1083 = vmul.f32 %v896, %v1067
        %v1084 = vmul.f32 %v898, %v1068
        %v1085 = vmul.f32 %v900, %v1069
        %v1086 = vmul.f32 %v902, %v1070
        %v1087 = vmul.f32 %v904, %v1071
        %v1088 = vmul.f32 %v906, %v1072
        %v1089 = vmul.f32 %v908, %v1073
        %v1090 = vmul.f32 %v910, %v1074
        %v1091 = vmul.f32 %v912, %v1075
        %v1092 = vmul.f32 %v914, %v1076
        %v1093 = vmul.f32 %v916, %v1077
        %v1094 = vmul.f32 %v918, %v1078
        %1095 = vadd.xlane.f32.xlu0 %v1047
        %v1096 = vpop.xlane.xlu0 %1095
        %1097 = vadd.xlane.f32.xlu0 %v1048
        %v1098 = vpop.xlane.xlu0 %1097
        %1099 = vadd.xlane.f32.xlu0 %v1049
        %v1100 = vpop.xlane.xlu0 %1099
        %1101 = vadd.xlane.f32.xlu0 %v1050
        %v1102 = vpop.xlane.xlu0 %1101
        %1103 = vadd.xlane.f32.xlu0 %v1051
        %v1104 = vpop.xlane.xlu0 %1103
        %1105 = vadd.xlane.f32.xlu0 %v1052
        %v1106 = vpop.xlane.xlu0 %1105
        %1107 = vadd.xlane.f32.xlu0 %v1053
        %v1108 = vpop.xlane.xlu0 %1107
        %1109 = vadd.xlane.f32.xlu0 %v1054
        %v1110 = vpop.xlane.xlu0 %1109
        %1111 = vadd.xlane.f32.xlu0 %v1055
        %v1112 = vpop.xlane.xlu0 %1111
        %1113 = vadd.xlane.f32.xlu0 %v1056
        %v1114 = vpop.xlane.xlu0 %1113
        %1115 = vadd.xlane.f32.xlu0 %v1057
        %v1116 = vpop.xlane.xlu0 %1115
        %1117 = vadd.xlane.f32.xlu0 %v1058
        %v1118 = vpop.xlane.xlu0 %1117
        %1119 = vadd.xlane.f32.xlu0 %v1059
        %v1120 = vpop.xlane.xlu0 %1119
        %1121 = vadd.xlane.f32.xlu0 %v1060
        %v1122 = vpop.xlane.xlu0 %1121
        %1123 = vadd.xlane.f32.xlu0 %v1061
        %v1124 = vpop.xlane.xlu0 %1123
        %1125 = vadd.xlane.f32.xlu0 %v1062
        %v1126 = vpop.xlane.xlu0 %1125
        %v1127 = vadd.f32 %v1079, %v1096
        %v1128 = vadd.f32 %v1080, %v1098
        %v1129 = vadd.f32 %v1081, %v1100
        %v1130 = vadd.f32 %v1082, %v1102
        %v1131 = vadd.f32 %v1083, %v1104
        %v1132 = vadd.f32 %v1084, %v1106
        %v1133 = vadd.f32 %v1085, %v1108
        %v1134 = vadd.f32 %v1086, %v1110
        %v1135 = vadd.f32 %v1087, %v1112
        %v1136 = vadd.f32 %v1088, %v1114
        %v1137 = vadd.f32 %v1089, %v1116
        %v1138 = vadd.f32 %v1090, %v1118
        %v1139 = vadd.f32 %v1091, %v1120
        %v1140 = vadd.f32 %v1092, %v1122
        %v1141 = vadd.f32 %v1093, %v1124
        %v1142 = vadd.f32 %v1094, %v1126
        %vm1143 = vcmask 7168
        %1144 = vst.msk [vmem:[#allocation3] sm:$0xff] %vm1143, %v1127
        %1145 = vst.msk [vmem:[#allocation3 + $0x8] sm:$0xff] %vm1143, %v1128
        %1146 = vst.msk [vmem:[#allocation3 + $0x10] sm:$0xff] %vm1143, %v1129
        %1147 = vst.msk [vmem:[#allocation3 + $0x18] sm:$0xff] %vm1143, %v1130
        %1148 = vst.msk [vmem:[#allocation3 + $0x20] sm:$0xff] %vm1143, %v1131
        %1149 = vst.msk [vmem:[#allocation3 + $0x28] sm:$0xff] %vm1143, %v1132
        %1150 = vst.msk [vmem:[#allocation3 + $0x30] sm:$0xff] %vm1143, %v1133
        %1151 = vst.msk [vmem:[#allocation3 + $0x38] sm:$0xff] %vm1143, %v1134
        %1152 = vst.msk [vmem:[#allocation3 + $0x40] sm:$0xff] %vm1143, %v1135
        %1153 = vst.msk [vmem:[#allocation3 + $0x48] sm:$0xff] %vm1143, %v1136
        %1154 = vst.msk [vmem:[#allocation3 + $0x50] sm:$0xff] %vm1143, %v1137
        %1155 = vst.msk [vmem:[#allocation3 + $0x58] sm:$0xff] %vm1143, %v1138
        %1156 = vst.msk [vmem:[#allocation3 + $0x60] sm:$0xff] %vm1143, %v1139
        %1157 = vst.msk [vmem:[#allocation3 + $0x68] sm:$0xff] %vm1143, %v1140
        %1158 = vst.msk [vmem:[#allocation3 + $0x70] sm:$0xff] %vm1143, %v1141
        %1159 = vst.msk [vmem:[#allocation3 + $0x78] sm:$0xff] %vm1143, %v1142
        %v1160 = vld [vmem:[#allocation4] sm:$0xff]
        %v1161 = vld [vmem:[#allocation4 + $0x8] sm:$0xff]
        %v1162 = vld [vmem:[#allocation4 + $0x10] sm:$0xff]
        %v1163 = vld [vmem:[#allocation4 + $0x18] sm:$0xff]
        %v1164 = vld [vmem:[#allocation4 + $0x20] sm:$0xff]
        %v1165 = vld [vmem:[#allocation4 + $0x28] sm:$0xff]
        %v1166 = vld [vmem:[#allocation4 + $0x30] sm:$0xff]
        %v1167 = vld [vmem:[#allocation4 + $0x38] sm:$0xff]
        %v1168 = vld [vmem:[#allocation4 + $0x40] sm:$0xff]
        %v1169 = vld [vmem:[#allocation4 + $0x48] sm:$0xff]
        %v1170 = vld [vmem:[#allocation4 + $0x50] sm:$0xff]
        %v1171 = vld [vmem:[#allocation4 + $0x58] sm:$0xff]
        %v1172 = vld [vmem:[#allocation4 + $0x60] sm:$0xff]
        %v1173 = vld [vmem:[#allocation4 + $0x68] sm:$0xff]
        %v1174 = vld [vmem:[#allocation4 + $0x70] sm:$0xff]
        %v1175 = vld [vmem:[#allocation4 + $0x78] sm:$0xff]
        %1177 = vset.pattern.permute.xlu0 0
        %1178 = vperm.xlu0 %1177, %v888
        %v1179 = vpop.permute.xlu0 %1178
        %1182 = vset.pattern.permute.xlu0 0
        %1183 = vperm.xlu0 %1182, %v890
        %v1184 = vpop.permute.xlu0 %1183
        %1187 = vset.pattern.permute.xlu0 0
        %1188 = vperm.xlu0 %1187, %v892
        %v1189 = vpop.permute.xlu0 %1188
        %1192 = vset.pattern.permute.xlu0 0
        %1193 = vperm.xlu0 %1192, %v894
        %v1194 = vpop.permute.xlu0 %1193
        %1197 = vset.pattern.permute.xlu0 0
        %1198 = vperm.xlu0 %1197, %v896
        %v1199 = vpop.permute.xlu0 %1198
        %1202 = vset.pattern.permute.xlu0 0
        %1203 = vperm.xlu0 %1202, %v898
        %v1204 = vpop.permute.xlu0 %1203
        %1207 = vset.pattern.permute.xlu0 0
        %1208 = vperm.xlu0 %1207, %v900
        %v1209 = vpop.permute.xlu0 %1208
        %1212 = vset.pattern.permute.xlu0 0
        %1213 = vperm.xlu0 %1212, %v902
        %v1214 = vpop.permute.xlu0 %1213
        %1217 = vset.pattern.permute.xlu0 0
        %1218 = vperm.xlu0 %1217, %v904
        %v1219 = vpop.permute.xlu0 %1218
        %1222 = vset.pattern.permute.xlu0 0
        %1223 = vperm.xlu0 %1222, %v906
        %v1224 = vpop.permute.xlu0 %1223
        %1227 = vset.pattern.permute.xlu0 0
        %1228 = vperm.xlu0 %1227, %v908
        %v1229 = vpop.permute.xlu0 %1228
        %1232 = vset.pattern.permute.xlu0 0
        %1233 = vperm.xlu0 %1232, %v910
        %v1234 = vpop.permute.xlu0 %1233
        %1237 = vset.pattern.permute.xlu0 0
        %1238 = vperm.xlu0 %1237, %v912
        %v1239 = vpop.permute.xlu0 %1238
        %1242 = vset.pattern.permute.xlu0 0
        %1243 = vperm.xlu0 %1242, %v914
        %v1244 = vpop.permute.xlu0 %1243
        %1247 = vset.pattern.permute.xlu0 0
        %1248 = vperm.xlu0 %1247, %v916
        %v1249 = vpop.permute.xlu0 %1248
        %1252 = vset.pattern.permute.xlu0 0
        %1253 = vperm.xlu0 %1252, %v918
        %v1254 = vpop.permute.xlu0 %1253
        %v1256 = vmul.f32 %v1179, %v1160
        %v1257 = vmul.f32 %v1184, %v1161
        %v1258 = vmul.f32 %v1189, %v1162
        %v1259 = vmul.f32 %v1194, %v1163
        %v1260 = vmul.f32 %v1199, %v1164
        %v1261 = vmul.f32 %v1204, %v1165
        %v1262 = vmul.f32 %v1209, %v1166
        %v1263 = vmul.f32 %v1214, %v1167
        %v1264 = vmul.f32 %v1219, %v1168
        %v1265 = vmul.f32 %v1224, %v1169
        %v1266 = vmul.f32 %v1229, %v1170
        %v1267 = vmul.f32 %v1234, %v1171
        %v1268 = vmul.f32 %v1239, %v1172
        %v1269 = vmul.f32 %v1244, %v1173
        %v1270 = vmul.f32 %v1249, %v1174
        %v1271 = vmul.f32 %v1254, %v1175
        %v1272 = vpack.c.bf16 %v1048, %v1047
        %v1273 = vpack.c.bf16 %v1050, %v1049
        %v1274 = vpack.c.bf16 %v1052, %v1051
        %v1275 = vpack.c.bf16 %v1054, %v1053
        %v1276 = vpack.c.bf16 %v1056, %v1055
        %v1277 = vpack.c.bf16 %v1058, %v1057
        %v1278 = vpack.c.bf16 %v1060, %v1059
        %v1279 = vpack.c.bf16 %v1062, %v1061
        %v1280 = vld [vmem:[%s360] sm:$0xf]
        %v1281 = vld [vmem:[%s360 + $0x4] sm:$0xf]
        %v1282 = vld [vmem:[%s360 + $0x8] sm:$0xf]
        %v1283 = vld [vmem:[%s360 + $0xc] sm:$0xf]
        %v1284 = vld [vmem:[%s360 + $0x10] sm:$0xf]
        %v1285 = vld [vmem:[%s360 + $0x14] sm:$0xf]
        %v1286 = vld [vmem:[%s360 + $0x18] sm:$0xf]
        %v1287 = vld [vmem:[%s360 + $0x1c] sm:$0xf]
        %v1288 = vld [vmem:[%s360 + $0x20] sm:$0xf]
        %v1289 = vld [vmem:[%s360 + $0x24] sm:$0xf]
        %v1290 = vld [vmem:[%s360 + $0x28] sm:$0xf]
        %v1291 = vld [vmem:[%s360 + $0x2c] sm:$0xf]
        %v1292 = vld [vmem:[%s360 + $0x30] sm:$0xf]
        %v1293 = vld [vmem:[%s360 + $0x34] sm:$0xf]
        %v1294 = vld [vmem:[%s360 + $0x38] sm:$0xf]
        %v1295 = vld [vmem:[%s360 + $0x3c] sm:$0xf]
        %v1312 = vunpack.c.l.b16 %v1280
        %v1313 = vunpack.c.l.b16 %v1281
        %v1314 = vunpack.c.l.b16 %v1282
        %v1315 = vunpack.c.l.b16 %v1283
        %v1316 = vunpack.c.l.b16 %v1284
        %v1317 = vunpack.c.l.b16 %v1285
        %v1318 = vunpack.c.l.b16 %v1286
        %v1319 = vunpack.c.l.b16 %v1287
        %v1320 = vunpack.c.l.b16 %v1288
        %v1321 = vunpack.c.l.b16 %v1289
        %v1322 = vunpack.c.l.b16 %v1290
        %v1323 = vunpack.c.l.b16 %v1291
        %v1324 = vunpack.c.l.b16 %v1292
        %v1325 = vunpack.c.l.b16 %v1293
        %v1326 = vunpack.c.l.b16 %v1294
        %v1327 = vunpack.c.l.b16 %v1295
        %v1328 = vpack.c.b16 %v1313, %v1312
        %v1329 = vpack.c.b16 %v1315, %v1314
        %v1330 = vpack.c.b16 %v1317, %v1316
        %v1331 = vpack.c.b16 %v1319, %v1318
        %v1332 = vpack.c.b16 %v1321, %v1320
        %v1333 = vpack.c.b16 %v1323, %v1322
        %v1334 = vpack.c.b16 %v1325, %v1324
        %v1335 = vpack.c.b16 %v1327, %v1326
        %1344 = vmatprep.subr.bf16.mxu0 0
        %1345 = vmatpush1.bf16.msra.mxu0 %v1328
        %1346 = vmatprep.subr.bf16.mxu0 0
        %1347 = vmatpush1.bf16.msra.mxu0 %v1329
        %1348 = vmatprep.subr.bf16.mxu0 0
        %1349 = vmatpush1.bf16.msra.mxu0 %v1330
        %1350 = vmatprep.subr.bf16.mxu0 0
        %1351 = vmatpush1.bf16.msra.mxu0 %v1331
        %1352 = vmatprep.subr.bf16.mxu0 0
        %1353 = vmatpush1.bf16.msra.mxu0 %v1332
        %1354 = vmatprep.subr.bf16.mxu0 0
        %1355 = vmatpush1.bf16.msra.mxu0 %v1333
        %1356 = vmatprep.subr.bf16.mxu0 0
        %1357 = vmatpush1.bf16.msra.mxu0 %v1334
        %1358 = vmatprep.subr.bf16.mxu0 0
        %1359 = vmatpush1.bf16.msra.mxu0 %v1335
        %1360 = vmatprep.subr.bf16.mxu0 0
        %1361 = vmatpush1.bf16.msra.mxu0 0
        %1362 = vmatprep.subr.bf16.mxu0 0
        %1363 = vmatpush1.bf16.msra.mxu0 0
        %1364 = vmatprep.subr.bf16.mxu0 0
        %1365 = vmatpush1.bf16.msra.mxu0 0
        %1366 = vmatprep.subr.bf16.mxu0 0
        %1367 = vmatpush1.bf16.msra.mxu0 0
        %1368 = vmatprep.subr.bf16.mxu0 0
        %1369 = vmatpush1.bf16.msra.mxu0 0
        %1370 = vmatprep.subr.bf16.mxu0 0
        %1371 = vmatpush1.bf16.msra.mxu0 0
        %1372 = vmatprep.subr.bf16.mxu0 0
        %1373 = vmatpush1.bf16.msra.mxu0 0
        %1374 = vmatprep.subr.bf16.mxu0 0
        %1375 = vmatpush1.bf16.msra.mxu0 0
        %1376 = vmatprep.mubr.bf16.mxu0 0
        %1377 = vmatmul.mubr.bf16.gmra.mrb[0].mxu0 %v1272
        %v1378 = vpop.f32.mrb[0].mxu0
        %v1379 = vadd.f32 0.0, %v1378
        %v1380 = vpop.f32.mrb[0].mxu0
        %v1381 = vpop.f32.mrb[0].mxu0
        %v1382 = vadd.f32 0.0, %v1381
        %v1383 = vpop.f32.mrb[0].mxu0
        %1384 = vmatprep.mubr.bf16.mxu0 0
        %1385 = vmatmul.mubr.bf16.gmra.mrb[0].mxu0 %v1273
        %v1386 = vpop.f32.mrb[0].mxu0
        %v1387 = vadd.f32 0.0, %v1386
        %v1388 = vpop.f32.mrb[0].mxu0
        %v1389 = vpop.f32.mrb[0].mxu0
        %v1390 = vadd.f32 0.0, %v1389
        %v1391 = vpop.f32.mrb[0].mxu0
        %1392 = vmatprep.mubr.bf16.mxu0 0
        %1393 = vmatmul.mubr.bf16.gmra.mrb[0].mxu0 %v1274
        %v1394 = vpop.f32.mrb[0].mxu0
        %v1395 = vadd.f32 0.0, %v1394
        %v1396 = vpop.f32.mrb[0].mxu0
        %v1397 = vpop.f32.mrb[0].mxu0
        %v1398 = vadd.f32 0.0, %v1397
        %v1399 = vpop.f32.mrb[0].mxu0
        %1400 = vmatprep.mubr.bf16.mxu0 0
        %1401 = vmatmul.mubr.bf16.gmra.mrb[0].mxu0 %v1275
        %v1402 = vpop.f32.mrb[0].mxu0
        %v1403 = vadd.f32 0.0, %v1402
        %v1404 = vpop.f32.mrb[0].mxu0
        %v1405 = vpop.f32.mrb[0].mxu0
        %v1406 = vadd.f32 0.0, %v1405
        %v1407 = vpop.f32.mrb[0].mxu0
        %1408 = vmatprep.mubr.bf16.mxu0 0
        %1409 = vmatmul.mubr.bf16.gmra.mrb[0].mxu0 %v1276
        %v1410 = vpop.f32.mrb[0].mxu0
        %v1411 = vadd.f32 0.0, %v1410
        %v1412 = vpop.f32.mrb[0].mxu0
        %v1413 = vpop.f32.mrb[0].mxu0
        %v1414 = vadd.f32 0.0, %v1413
        %v1415 = vpop.f32.mrb[0].mxu0
        %1416 = vmatprep.mubr.bf16.mxu0 0
        %1417 = vmatmul.mubr.bf16.gmra.mrb[0].mxu0 %v1277
        %v1418 = vpop.f32.mrb[0].mxu0
        %v1419 = vadd.f32 0.0, %v1418
        %v1420 = vpop.f32.mrb[0].mxu0
        %v1421 = vpop.f32.mrb[0].mxu0
        %v1422 = vadd.f32 0.0, %v1421
        %v1423 = vpop.f32.mrb[0].mxu0
        %1424 = vmatprep.mubr.bf16.mxu0 0
        %1425 = vmatmul.mubr.bf16.gmra.mrb[0].mxu0 %v1278
        %v1426 = vpop.f32.mrb[0].mxu0
        %v1427 = vadd.f32 0.0, %v1426
        %v1428 = vpop.f32.mrb[0].mxu0
        %v1429 = vpop.f32.mrb[0].mxu0
        %v1430 = vadd.f32 0.0, %v1429
        %v1431 = vpop.f32.mrb[0].mxu0
        %1432 = vmatprep.mubr.bf16.mxu0 0
        %1433 = vmatmul.mubr.bf16.gmra.mrb[0].mxu0 %v1279
        %v1434 = vpop.f32.mrb[0].mxu0
        %v1435 = vadd.f32 0.0, %v1434
        %v1436 = vpop.f32.mrb[0].mxu0
        %v1437 = vpop.f32.mrb[0].mxu0
        %v1438 = vadd.f32 0.0, %v1437
        %v1439 = vpop.f32.mrb[0].mxu0
        %1440 = vdwg.mxu0
        %v1441 = vadd.f32 %v1256, %v1379
        %v1442 = vadd.f32 %v1257, %v1382
        %v1443 = vadd.f32 %v1258, %v1387
        %v1444 = vadd.f32 %v1259, %v1390
        %v1445 = vadd.f32 %v1260, %v1395
        %v1446 = vadd.f32 %v1261, %v1398
        %v1447 = vadd.f32 %v1262, %v1403
        %v1448 = vadd.f32 %v1263, %v1406
        %v1449 = vadd.f32 %v1264, %v1411
        %v1450 = vadd.f32 %v1265, %v1414
        %v1451 = vadd.f32 %v1266, %v1419
        %v1452 = vadd.f32 %v1267, %v1422
        %v1453 = vadd.f32 %v1268, %v1427
        %v1454 = vadd.f32 %v1269, %v1430
        %v1455 = vadd.f32 %v1270, %v1435
        %v1456 = vadd.f32 %v1271, %v1438
        %1457 = vst.msk [vmem:[#allocation4] sm:$0xff] %vm560, %v1441
        %1458 = vst.msk [vmem:[#allocation4 + $0x8] sm:$0xff] %vm560, %v1442
        %1459 = vst.msk [vmem:[#allocation4 + $0x10] sm:$0xff] %vm560, %v1443
        %1460 = vst.msk [vmem:[#allocation4 + $0x18] sm:$0xff] %vm560, %v1444
        %1461 = vst.msk [vmem:[#allocation4 + $0x20] sm:$0xff] %vm560, %v1445
        %1462 = vst.msk [vmem:[#allocation4 + $0x28] sm:$0xff] %vm560, %v1446
        %1463 = vst.msk [vmem:[#allocation4 + $0x30] sm:$0xff] %vm560, %v1447
        %1464 = vst.msk [vmem:[#allocation4 + $0x38] sm:$0xff] %vm560, %v1448
        %1465 = vst.msk [vmem:[#allocation4 + $0x40] sm:$0xff] %vm560, %v1449
        %1466 = vst.msk [vmem:[#allocation4 + $0x48] sm:$0xff] %vm560, %v1450
        %1467 = vst.msk [vmem:[#allocation4 + $0x50] sm:$0xff] %vm560, %v1451
        %1468 = vst.msk [vmem:[#allocation4 + $0x58] sm:$0xff] %vm560, %v1452
        %1469 = vst.msk [vmem:[#allocation4 + $0x60] sm:$0xff] %vm560, %v1453
        %1470 = vst.msk [vmem:[#allocation4 + $0x68] sm:$0xff] %vm560, %v1454
        %1471 = vst.msk [vmem:[#allocation4 + $0x70] sm:$0xff] %vm560, %v1455
        %1472 = vst.msk [vmem:[#allocation4 + $0x78] sm:$0xff] %vm560, %v1456
        %1473 = vst.msk [vmem:[#allocation2] sm:$0xff] %vm1143, %v855
        %1474 = vst.msk [vmem:[#allocation2 + $0x8] sm:$0xff] %vm1143, %v856
        %1475 = vst.msk [vmem:[#allocation2 + $0x10] sm:$0xff] %vm1143, %v857
        %1476 = vst.msk [vmem:[#allocation2 + $0x18] sm:$0xff] %vm1143, %v858
        %1477 = vst.msk [vmem:[#allocation2 + $0x20] sm:$0xff] %vm1143, %v859
        %1478 = vst.msk [vmem:[#allocation2 + $0x28] sm:$0xff] %vm1143, %v860
        %1479 = vst.msk [vmem:[#allocation2 + $0x30] sm:$0xff] %vm1143, %v861
        %1480 = vst.msk [vmem:[#allocation2 + $0x38] sm:$0xff] %vm1143, %v862
        %1481 = vst.msk [vmem:[#allocation2 + $0x40] sm:$0xff] %vm1143, %v863
        %1482 = vst.msk [vmem:[#allocation2 + $0x48] sm:$0xff] %vm1143, %v864
        %1483 = vst.msk [vmem:[#allocation2 + $0x50] sm:$0xff] %vm1143, %v865
        %1484 = vst.msk [vmem:[#allocation2 + $0x58] sm:$0xff] %vm1143, %v866
        %1485 = vst.msk [vmem:[#allocation2 + $0x60] sm:$0xff] %vm1143, %v867
        %1486 = vst.msk [vmem:[#allocation2 + $0x68] sm:$0xff] %vm1143, %v868
        %1487 = vst.msk [vmem:[#allocation2 + $0x70] sm:$0xff] %vm1143, %v869
        %1488 = vst.msk [vmem:[#allocation2 + $0x78] sm:$0xff] %vm1143, %v870
      $region48: #{vision_attention_forward.4} parent=39 // pred_fallthru
        _
      // Predicated region
      $region49: #{vision_attention_forward.4} parent=39 // pred_check
        %p1489 = pneg %p382
      $region50: #{vision_attention_forward.4} parent=39 // pred_check_branch
        %1491 = sbr.rel (%p1489) target = $region52
      $region51: #{vision_attention_forward.4} parent=39 // pred_region
        %v1492 = vld [vmem:[#allocation4] sm:$0xff]
        %v1493 = vld [vmem:[#allocation4 + $0x8] sm:$0xff]
        %v1494 = vld [vmem:[#allocation4 + $0x10] sm:$0xff]
        %v1495 = vld [vmem:[#allocation4 + $0x18] sm:$0xff]
        %v1496 = vld [vmem:[#allocation4 + $0x20] sm:$0xff]
        %v1497 = vld [vmem:[#allocation4 + $0x28] sm:$0xff]
        %v1498 = vld [vmem:[#allocation4 + $0x30] sm:$0xff]
        %v1499 = vld [vmem:[#allocation4 + $0x38] sm:$0xff]
        %v1500 = vld [vmem:[#allocation4 + $0x40] sm:$0xff]
        %v1501 = vld [vmem:[#allocation4 + $0x48] sm:$0xff]
        %v1502 = vld [vmem:[#allocation4 + $0x50] sm:$0xff]
        %v1503 = vld [vmem:[#allocation4 + $0x58] sm:$0xff]
        %v1504 = vld [vmem:[#allocation4 + $0x60] sm:$0xff]
        %v1505 = vld [vmem:[#allocation4 + $0x68] sm:$0xff]
        %v1506 = vld [vmem:[#allocation4 + $0x70] sm:$0xff]
        %v1507 = vld [vmem:[#allocation4 + $0x78] sm:$0xff]
        %v1508 = vld [vmem:[#allocation3] sm:$0xff]
        %v1509 = vld [vmem:[#allocation3 + $0x8] sm:$0xff]
        %v1510 = vld [vmem:[#allocation3 + $0x10] sm:$0xff]
        %v1511 = vld [vmem:[#allocation3 + $0x18] sm:$0xff]
        %v1512 = vld [vmem:[#allocation3 + $0x20] sm:$0xff]
        %v1513 = vld [vmem:[#allocation3 + $0x28] sm:$0xff]
        %v1514 = vld [vmem:[#allocation3 + $0x30] sm:$0xff]
        %v1515 = vld [vmem:[#allocation3 + $0x38] sm:$0xff]
        %v1516 = vld [vmem:[#allocation3 + $0x40] sm:$0xff]
        %v1517 = vld [vmem:[#allocation3 + $0x48] sm:$0xff]
        %v1518 = vld [vmem:[#allocation3 + $0x50] sm:$0xff]
        %v1519 = vld [vmem:[#allocation3 + $0x58] sm:$0xff]
        %v1520 = vld [vmem:[#allocation3 + $0x60] sm:$0xff]
        %v1521 = vld [vmem:[#allocation3 + $0x68] sm:$0xff]
        %v1522 = vld [vmem:[#allocation3 + $0x70] sm:$0xff]
        %v1523 = vld [vmem:[#allocation3 + $0x78] sm:$0xff]
        %v1524 = vrcp.pop %v1508
        %v1525 = vrcp.pop %v1509
        %v1526 = vrcp.pop %v1510
        %v1527 = vrcp.pop %v1511
        %v1528 = vrcp.pop %v1512
        %v1529 = vrcp.pop %v1513
        %v1530 = vrcp.pop %v1514
        %v1531 = vrcp.pop %v1515
        %v1532 = vrcp.pop %v1516
        %v1533 = vrcp.pop %v1517
        %v1534 = vrcp.pop %v1518
        %v1535 = vrcp.pop %v1519
        %v1536 = vrcp.pop %v1520
        %v1537 = vrcp.pop %v1521
        %v1538 = vrcp.pop %v1522
        %v1539 = vrcp.pop %v1523
        %1541 = vset.pattern.permute.xlu0 0
        %1542 = vperm.xlu0 %1541, %v1524
        %v1543 = vpop.permute.xlu0 %1542
        %1546 = vset.pattern.permute.xlu0 0
        %1547 = vperm.xlu0 %1546, %v1525
        %v1548 = vpop.permute.xlu0 %1547
        %1551 = vset.pattern.permute.xlu0 0
        %1552 = vperm.xlu0 %1551, %v1526
        %v1553 = vpop.permute.xlu0 %1552
        %1556 = vset.pattern.permute.xlu0 0
        %1557 = vperm.xlu0 %1556, %v1527
        %v1558 = vpop.permute.xlu0 %1557
        %1561 = vset.pattern.permute.xlu0 0
        %1562 = vperm.xlu0 %1561, %v1528
        %v1563 = vpop.permute.xlu0 %1562
        %1566 = vset.pattern.permute.xlu0 0
        %1567 = vperm.xlu0 %1566, %v1529
        %v1568 = vpop.permute.xlu0 %1567
        %1571 = vset.pattern.permute.xlu0 0
        %1572 = vperm.xlu0 %1571, %v1530
        %v1573 = vpop.permute.xlu0 %1572
        %1576 = vset.pattern.permute.xlu0 0
        %1577 = vperm.xlu0 %1576, %v1531
        %v1578 = vpop.permute.xlu0 %1577
        %1581 = vset.pattern.permute.xlu0 0
        %1582 = vperm.xlu0 %1581, %v1532
        %v1583 = vpop.permute.xlu0 %1582
        %1586 = vset.pattern.permute.xlu0 0
        %1587 = vperm.xlu0 %1586, %v1533
        %v1588 = vpop.permute.xlu0 %1587
        %1591 = vset.pattern.permute.xlu0 0
        %1592 = vperm.xlu0 %1591, %v1534
        %v1593 = vpop.permute.xlu0 %1592
        %1596 = vset.pattern.permute.xlu0 0
        %1597 = vperm.xlu0 %1596, %v1535
        %v1598 = vpop.permute.xlu0 %1597
        %1601 = vset.pattern.permute.xlu0 0
        %1602 = vperm.xlu0 %1601, %v1536
        %v1603 = vpop.permute.xlu0 %1602
        %1606 = vset.pattern.permute.xlu0 0
        %1607 = vperm.xlu0 %1606, %v1537
        %v1608 = vpop.permute.xlu0 %1607
        %1611 = vset.pattern.permute.xlu0 0
        %1612 = vperm.xlu0 %1611, %v1538
        %v1613 = vpop.permute.xlu0 %1612
        %1616 = vset.pattern.permute.xlu0 0
        %1617 = vperm.xlu0 %1616, %v1539
        %v1618 = vpop.permute.xlu0 %1617
        %v1620 = vmul.f32 %v1492, %v1543
        %v1621 = vmul.f32 %v1493, %v1548
        %v1622 = vmul.f32 %v1494, %v1553
        %v1623 = vmul.f32 %v1495, %v1558
        %v1624 = vmul.f32 %v1496, %v1563
        %v1625 = vmul.f32 %v1497, %v1568
        %v1626 = vmul.f32 %v1498, %v1573
        %v1627 = vmul.f32 %v1499, %v1578
        %v1628 = vmul.f32 %v1500, %v1583
        %v1629 = vmul.f32 %v1501, %v1588
        %v1630 = vmul.f32 %v1502, %v1593
        %v1631 = vmul.f32 %v1503, %v1598
        %v1632 = vmul.f32 %v1504, %v1603
        %v1633 = vmul.f32 %v1505, %v1608
        %v1634 = vmul.f32 %v1506, %v1613
        %v1635 = vmul.f32 %v1507, %v1618
        %v1636 = vpack.c.bf16 %v1621, %v1620
        %v1637 = vpack.c.bf16 %v1623, %v1622
        %v1638 = vpack.c.bf16 %v1625, %v1624
        %v1639 = vpack.c.bf16 %v1627, %v1626
        %v1640 = vpack.c.bf16 %v1629, %v1628
        %v1641 = vpack.c.bf16 %v1631, %v1630
        %v1642 = vpack.c.bf16 %v1633, %v1632
        %v1643 = vpack.c.bf16 %v1635, %v1634
        %v1652 = vunpack.c.l.b16 %v1636
        %v1653 = vunpack.c.h.b16 %v1636
        %v1654 = vunpack.c.l.b16 %v1637
        %v1655 = vunpack.c.h.b16 %v1637
        %v1656 = vunpack.c.l.b16 %v1638
        %v1657 = vunpack.c.h.b16 %v1638
        %v1658 = vunpack.c.l.b16 %v1639
        %v1659 = vunpack.c.h.b16 %v1639
        %v1660 = vunpack.c.l.b16 %v1640
        %v1661 = vunpack.c.h.b16 %v1640
        %v1662 = vunpack.c.l.b16 %v1641
        %v1663 = vunpack.c.h.b16 %v1641
        %v1664 = vunpack.c.l.b16 %v1642
        %v1665 = vunpack.c.h.b16 %v1642
        %v1666 = vunpack.c.l.b16 %v1643
        %v1667 = vunpack.c.h.b16 %v1643
        %v1668 = vpack.c.b16 %v1652, %v1652
        %v1669 = vpack.c.b16 %v1653, %v1653
        %v1670 = vpack.c.b16 %v1654, %v1654
        %v1671 = vpack.c.b16 %v1655, %v1655
        %v1672 = vpack.c.b16 %v1656, %v1656
        %v1673 = vpack.c.b16 %v1657, %v1657
        %v1674 = vpack.c.b16 %v1658, %v1658
        %v1675 = vpack.c.b16 %v1659, %v1659
        %v1676 = vpack.c.b16 %v1660, %v1660
        %v1677 = vpack.c.b16 %v1661, %v1661
        %v1678 = vpack.c.b16 %v1662, %v1662
        %v1679 = vpack.c.b16 %v1663, %v1663
        %v1680 = vpack.c.b16 %v1664, %v1664
        %v1681 = vpack.c.b16 %v1665, %v1665
        %v1682 = vpack.c.b16 %v1666, %v1666
        %v1683 = vpack.c.b16 %v1667, %v1667
        %vm1700 = vcmask 257024
        %1701 = vst.msk [vmem:[%s379] sm:$0xf] %vm1700, %v1668
        %1702 = vst.msk [vmem:[%s379 + $0x4] sm:$0xf] %vm1700, %v1669
        %1703 = vst.msk [vmem:[%s379 + $0x8] sm:$0xf] %vm1700, %v1670
        %1704 = vst.msk [vmem:[%s379 + $0xc] sm:$0xf] %vm1700, %v1671
        %1705 = vst.msk [vmem:[%s379 + $0x10] sm:$0xf] %vm1700, %v1672
        %1706 = vst.msk [vmem:[%s379 + $0x14] sm:$0xf] %vm1700, %v1673
        %1707 = vst.msk [vmem:[%s379 + $0x18] sm:$0xf] %vm1700, %v1674
        %1708 = vst.msk [vmem:[%s379 + $0x1c] sm:$0xf] %vm1700, %v1675
        %1709 = vst.msk [vmem:[%s379 + $0x20] sm:$0xf] %vm1700, %v1676
        %1710 = vst.msk [vmem:[%s379 + $0x24] sm:$0xf] %vm1700, %v1677
        %1711 = vst.msk [vmem:[%s379 + $0x28] sm:$0xf] %vm1700, %v1678
        %1712 = vst.msk [vmem:[%s379 + $0x2c] sm:$0xf] %vm1700, %v1679
        %1713 = vst.msk [vmem:[%s379 + $0x30] sm:$0xf] %vm1700, %v1680
        %1714 = vst.msk [vmem:[%s379 + $0x34] sm:$0xf] %vm1700, %v1681
        %1715 = vst.msk [vmem:[%s379 + $0x38] sm:$0xf] %vm1700, %v1682
        %1716 = vst.msk [vmem:[%s379 + $0x3c] sm:$0xf] %vm1700, %v1683
      $region52: #{vision_attention_forward.4} parent=39 // pred_fallthru
        _
      %s1717 = smul.u32 16, %s24
      %p1718 = scmp.lt.s32.totalorder %s23, 3
      %s1719 = scalar_select %p1718, %s23, 3
      %p1720 = scmp.lt.s32.totalorder %s1717, 15
      %s1721 = scalar_select %p1720, %s1717, 15
      %s1722 = smul.addr %s1719, 16
      %s1723 = sadd.s32 %s1721, %s1722
      %s1724 = smul.addr %s1723, 4
      %s1725 = scalar_lea.vmem %s6, %s1724
      // Predicated region
      $region53: #{vision_attention_forward.4} parent=39 // pred_check
        %p1726 = pneg %p193
      $region54: #{vision_attention_forward.4} parent=39 // pred_check_branch
        %1728 = sbr.rel (%p1726) target = $region56
      $region55: #{vision_attention_forward.4} parent=39 // pred_region
        %s1729 = smul.u32 16, %s24
      $region56: #{vision_attention_forward.4} parent=39 // pred_fallthru
        _
    $region40: #{vision_attention_forward.4} parent=5 // pred_fallthru
      _
    %p1730 = scmp.le.s32.totalorder 2, %s13
    // Predicated region
    $region57: #{vision_attention_forward.4} parent=5 // pred_check
      %p1731 = pneg %p1730
    $region58: #{vision_attention_forward.4} parent=5 // pred_check_branch
      %1733 = sbr.rel (%p1731) target = $region60
    $region59: #{vision_attention_forward.4} parent=5 // pred_region
      %s1734 = ssub.s32 %s13, 2
      // Predicated region
      $region61: #{vision_attention_forward.4} parent=59 // pred_check
        %p1735 = pneg %p199
      $region62: #{vision_attention_forward.4} parent=59 // pred_check_branch
        %1737 = sbr.rel (%p1735) target = $region64
      $region63: #{vision_attention_forward.4} parent=59 // pred_region
        %s1738 = smul.u32 16, %s27
        %p1739 = scmp.lt.s32.totalorder %s26, 3
        %s1740 = scalar_select %p1739, %s26, 3
        %p1741 = scmp.lt.s32.totalorder %s1738, 15
        %s1742 = scalar_select %p1741, %s1738, 15
        %s1743 = smul.addr %s1740, 16
        %s1744 = sadd.s32 %s1742, %s1743
        %s1745 = smul.addr %s1744, 4
        %s1746 = scalar_lea.vmem %s6, %s1745
      $region64: #{vision_attention_forward.4} parent=59 // pred_fallthru
        _
    $region60: #{vision_attention_forward.4} parent=5 // pred_fallthru
      _
  $region6: #{vision_attention_forward.4} parent=0 // loop_footer
    %s17 = sadd.s32 1, %s13
  $region7: #{vision_attention_forward.4} parent=0 // loop_footer_branch
    %12 = sbr.rel target = $region3
  $region8: #{vision_attention_forward.4} parent=0 // loop_exit
    _

</llo_original>
